<compile_context>
chip_gen: v7x
topology: tpu7x:2x2x1
jax: 0.10.0
libtpu: 0.0.40
codegen_flags: <defaults>
</compile_context>

<pallas_src>
import functools

import jax
import jax.numpy as jnp
from jax.experimental import pallas as pl
from jax.experimental.pallas import tpu as pltpu

EPS = 1e-5
# Explicit scoped-VMEM budget: raises v5e's 16 MiB default, stays safely inside
# v7x's 64 MiB physical VMEM. Tiles below are sized well under this.
_VMEM_LIMIT = 32 * 1024 * 1024


def _choose_tile(P, cap=2048):
    """Largest multiple of 128 that divides P and is <= cap (else the full extent)."""
    if P % 128 != 0:
        return P                      # full-extent block is always legal
    tp = min(P, (cap // 128) * 128)
    while P % tp != 0:
        tp -= 128
    return tp


# ---------- pass 1: BN1 statistics of y1 = conv1(relu(x)) --------------------------
def _stats1_kernel(x_ref, w1_ref, sum1_ref, sumsq1_ref):
    first = (pl.program_id(0) == 0) & (pl.program_id(1) == 0)

    @pl.when(first)
    def _():
        sum1_ref[...] = jnp.zeros_like(sum1_ref)
        sumsq1_ref[...] = jnp.zeros_like(sumsq1_ref)

    h = jnp.maximum(x_ref[...].astype(jnp.float32), 0.0)                 # ReLU
    y1 = jnp.dot(w1_ref[...], h, preferred_element_type=jnp.float32)     # (C, TP)
    sum1_ref[...] += jnp.sum(y1, axis=1, keepdims=True)
    sumsq1_ref[...] += jnp.sum(y1 * y1, axis=1, keepdims=True)


# ---------- pass 2: y2 = conv2(relu(bn1(conv1(relu(x))))) + BN2 statistics ---------
def _apply1_kernel(x_ref, w1_ref, s1_ref, t1_ref, w2_ref,
                   y2_ref, sum2_ref, sumsq2_ref):
    first = (pl.program_id(0) == 0) & (pl.program_id(1) == 0)

    @pl.when(first)
    def _():
        sum2_ref[...] = jnp.zeros_like(sum2_ref)
        sumsq2_ref[...] = jnp.zeros_like(sumsq2_ref)

    h = jnp.maximum(x_ref[...].astype(jnp.float32), 0.0)
    y1 = jnp.dot(w1_ref[...], h, preferred_element_type=jnp.float32)
    h = jnp.maximum(y1 * s1_ref[...] + t1_ref[...], 0.0)                 # folded BN1 + ReLU
    y2 = jnp.dot(w2_ref[...], h, preferred_element_type=jnp.float32)
    y2_ref[...] = y2
    sum2_ref[...] += jnp.sum(y2, axis=1, keepdims=True)
    sumsq2_ref[...] += jnp.sum(y2 * y2, axis=1, keepdims=True)


# ---------- pass 3: out = x + bn2(y2)  (folded scale/shift + residual) -------------
def _apply2_kernel(x_ref, y2_ref, s2_ref, t2_ref, o_ref):
    x = x_ref[...].astype(jnp.float32)
    o_ref[...] = (x + y2_ref[...] * s2_ref[...] + t2_ref[...]).astype(o_ref.dtype)


@functools.partial(jax.jit, static_argnames=("tile_p",))
def resblock_pallas(x_nchw, params, *, tile_p=2048):
    """x_nchw: (N, C, H, W).  params: dict from init_params (conv weights as (Cout, Cin),
    per-channel BN params as (C, 1) columns)."""
    N, C, H, W = x_nchw.shape
    P = H * W
    TP = _choose_tile(P, tile_p)
    grid = (N, P // TP)

    x3 = x_nchw.reshape(N, C, P)                     # pure reshape: no HBM transpose pass

    x_spec = pl.BlockSpec((None, C, TP), lambda n, p: (n, 0, p))
    tile_spec = pl.BlockSpec((None, C, TP), lambda n, p: (n, 0, p))
    w_spec = pl.BlockSpec((C, C), lambda n, p: (0, 0))
    v_spec = pl.BlockSpec((C, 1), lambda n, p: (0, 0))   # per-channel column vectors

    itemsize = jnp.dtype(x_nchw.dtype).itemsize
    x_bytes = N * C * P * itemsize
    y_bytes = N * C * P * 4

    # Stats passes keep a resident accumulator block -> grid must be "arbitrary".
    # (Cross-core stat reduction via CMEM would enable megacore here; single-core is
    #  kept for simplicity/correctness.)
    acc_params = pltpu.CompilerParams(
        dimension_semantics=("arbitrary", "arbitrary"),
        vmem_limit_bytes=_VMEM_LIMIT)
    par_params = pltpu.CompilerParams(
        dimension_semantics=("parallel", "parallel"),
        vmem_limit_bytes=_VMEM_LIMIT)

    # ---- pass 1: BN1 stats -----------------------------------------------------
    sum1, sumsq1 = pl.pallas_call(
        _stats1_kernel,
        grid=grid,
        in_specs=[x_spec, w_spec],
        out_specs=[v_spec, v_spec],
        out_shape=[jax.ShapeDtypeStruct((C, 1), jnp.float32),
                   jax.ShapeDtypeStruct((C, 1), jnp.float32)],
        compiler_params=acc_params,
        cost_estimate=pl.CostEstimate(
            flops=2 * N * P * C * C, transcendentals=0,
            bytes_accessed=x_bytes + C * C * 4 + 2 * C * 4),
    )(x3, params["w1"])

    cnt = float(N * P)
    mean1 = sum1 / cnt
    var1 = sumsq1 / cnt - mean1 * mean1              # biased batch variance, f32 accum
    s1 = params["g1"] * jax.lax.rsqrt(var1 + EPS)
    t1 = params["be1"] - mean1 * s1

    # ---- pass 2: apply BN1, conv2, BN2 stats -------------------------------------
    y2, sum2, sumsq2 = pl.pallas_call(
        _apply1_kernel,
        grid=grid,
        in_specs=[x_spec, w_spec, v_spec, v_spec, w_spec],
        out_specs=[tile_spec, v_spec, v_spec],
        out_shape=[jax.ShapeDtypeStruct((N, C, P), jnp.float32),
                   jax.ShapeDtypeStruct((C, 1), jnp.float32),
                   jax.ShapeDtypeStruct((C, 1), jnp.float32)],
        compiler_params=acc_params,
        cost_estimate=pl.CostEstimate(
            flops=4 * N * P * C * C, transcendentals=0,
            bytes_accessed=x_bytes + y_bytes + 2 * C * C * 4 + 4 * C * 4),
    )(x3, params["w1"], s1, t1, params["w2"])

    mean2 = sum2 / cnt
    var2 = sumsq2 / cnt - mean2 * mean2
    s2 = params["g2"] * jax.lax.rsqrt(var2 + EPS)
    t2 = params["be2"] - mean2 * s2

    # ---- pass 3: apply BN2 + residual (donate y2's buffer to the output) ----------
    io_alias = {1: 0} if x_nchw.dtype == jnp.float32 else {}
    out3 = pl.pallas_call(
        _apply2_kernel,
        grid=grid,
        in_specs=[x_spec, tile_spec, v_spec, v_spec],
        out_specs=tile_spec,
        out_shape=jax.ShapeDtypeStruct((N, C, P), x_nchw.dtype),
        compiler_params=par_params,
        input_output_aliases=io_alias,
        cost_estimate=pl.CostEstimate(
            flops=3 * N * C * P, transcendentals=0,
            bytes_accessed=x_bytes + 2 * y_bytes),
    )(x3, y2, s2, t2)

    return out3.reshape(N, C, H, W)


def resblock_reference(x_nchw, params):
    """Pure-JAX reference with the original module's exact semantics (incl. conv bias)."""
    N, C, H, W = x_nchw.shape
    x = x_nchw.astype(jnp.float32).reshape(N, C, H * W)

    def bn(h, g, be):
        m = jnp.mean(h, axis=(0, 2), keepdims=True)
        v = jnp.var(h, axis=(0, 2), keepdims=True)
        return (h - m) * jax.lax.rsqrt(v + EPS) * g[None] + be[None]

    h = jnp.maximum(x, 0.0)
    h = jnp.einsum("oc,ncp->nop", params["w1"], h) + params["b1"][None]
    h = bn(h, params["g1"], params["be1"])
    h = jnp.maximum(h, 0.0)
    h = jnp.einsum("oc,ncp->nop", params["w2"], h) + params["b2"][None]
    h = bn(h, params["g2"], params["be2"])
    return (x + h).reshape(N, C, H, W).astype(x_nchw.dtype)


def init_params(key, dim):
    """Conv weights in PyTorch layout (C_out, C_in) (1x1 kernel squeezed); per-channel
    conv-bias / BN params stored as (C, 1) columns so they broadcast over lanes."""
    ks = jax.random.split(key, 6)
    w1 = jax.random.normal(ks[0], (dim, dim), jnp.float32) * 0.1
    b1 = jax.random.normal(ks[1], (dim, 1), jnp.float32) * 0.1
    w2 = jax.random.normal(ks[2], (dim, dim), jnp.float32) * 0.1
    b2 = jax.random.normal(ks[3], (dim, 1), jnp.float32) * 0.1
    g1 = 1.0 + 0.1 * jax.random.normal(ks[4], (dim, 1), jnp.float32)
    be1 = jnp.zeros((dim, 1), jnp.float32)
    g2 = 1.0 + 0.1 * jax.random.normal(ks[5], (dim, 1), jnp.float32)
    be2 = jnp.zeros((dim, 1), jnp.float32)
    return {"w1": w1, "b1": b1, "g1": g1, "be1": be1,
            "w2": w2, "b2": b2, "g2": g2, "be2": be2}


if __name__ == "__main__":
    key = jax.random.PRNGKey(0)
    kx, kp = jax.random.split(key)

    N, C, H, W = 2, 4, 16, 16   # dim = 4
    x = jax.random.normal(kx, (N, C, H, W), jnp.float32)
    params = init_params(kp, C)

    out = jax.block_until_ready(resblock_pallas(x, params))
    ref = jax.block_until_ready(resblock_reference(x, params))

    assert out.shape == x.shape and out.dtype == x.dtype
    assert jnp.allclose(out, ref, atol=1e-4, rtol=1e-4), "mismatch vs reference"

    print("KERNEL_OK")
</pallas_src>

<mosaic_0001>
module attributes {stable_mosaic.version = 11 : i64} {
  func.func @_stats1_kernel(%arg0: i32, %arg1: i32, %arg2: memref<1x4x256xf32, #tpu.memory_space<vmem>>, %arg3: memref<4x4xf32, #tpu.memory_space<vmem>>, %arg4: memref<4x1xf32, #tpu.memory_space<vmem>>, %arg5: memref<4x1xf32, #tpu.memory_space<vmem>>) attributes {dimension_semantics = [#tpu.dimension_semantics<arbitrary>, #tpu.dimension_semantics<arbitrary>], iteration_bounds = array<i64: 2, 1>, scalar_prefetch = 0 : i64, scratch_operands = 0 : i64, tpu.core_type = #tpu.core_type<tc>, window_params = [{transform_indices = @transform_0, window_bounds = array<i64: 1, 4, 256>}, {pipeline_mode = #tpu.pipeline_mode<synchronous>, transform_indices = @transform_1, window_bounds = array<i64: 4, 4>}, {pipeline_mode = #tpu.pipeline_mode<synchronous>, transform_indices = @transform_2, window_bounds = array<i64: 4, 1>}, {pipeline_mode = #tpu.pipeline_mode<synchronous>, transform_indices = @transform_3, window_bounds = array<i64: 4, 1>}]} {
    %c0_i32 = arith.constant 0 : i32
    %0 = arith.cmpi eq, %arg0, %c0_i32 : i32
    %c0_i32_0 = arith.constant 0 : i32
    %1 = arith.cmpi eq, %arg1, %c0_i32_0 : i32
    %2 = arith.andi %0, %1 : i1
    %3 = arith.extui %2 : i1 to i32
    %c0_i32_1 = arith.constant 0 : i32
    %4 = arith.cmpi ne, %3, %c0_i32_1 : i32
    scf.if %4 {
      %cst_17 = arith.constant 0.000000e+00 : f32
      %22 = vector.broadcast %cst_17 : f32 to vector<4x1xf32>
      %c0_18 = arith.constant 0 : index
      %c0_19 = arith.constant 0 : index
      %23 = vector.load %arg4[%c0_18, %c0_19] : memref<4x1xf32, #tpu.memory_space<vmem>>, vector<4x1xf32>
      tpu.vector_store %arg4[%c0_18, %c0_19], %22 {strides = array<i32>} : memref<4x1xf32, #tpu.memory_space<vmem>>, vector<4x1xf32>,
      %cst_20 = arith.constant 0.000000e+00 : f32
      %24 = vector.broadcast %cst_20 : f32 to vector<4x1xf32>
      %c0_21 = arith.constant 0 : index
      %c0_22 = arith.constant 0 : index
      %25 = vector.load %arg5[%c0_21, %c0_22] : memref<4x1xf32, #tpu.memory_space<vmem>>, vector<4x1xf32>
      tpu.vector_store %arg5[%c0_21, %c0_22], %24 {strides = array<i32>} : memref<4x1xf32, #tpu.memory_space<vmem>>, vector<4x1xf32>,
    } else {
    }
    %c0 = arith.constant 0 : index
    %c0_2 = arith.constant 0 : index
    %c0_3 = arith.constant 0 : index
    %5 = vector.load %arg2[%c0, %c0_2, %c0_3] : memref<1x4x256xf32, #tpu.memory_space<vmem>>, vector<1x4x256xf32>
    %6 = vector.shape_cast %5 : vector<1x4x256xf32> to vector<4x256xf32>
    %cst = arith.constant 0.000000e+00 : f32
    %7 = vector.broadcast %cst : f32 to vector<4x256xf32>
    %8 = arith.maximumf %6, %7 : vector<4x256xf32>
    %c0_4 = arith.constant 0 : index
    %c0_5 = arith.constant 0 : index
    %9 = vector.load %arg3[%c0_4, %c0_5] : memref<4x4xf32, #tpu.memory_space<vmem>>, vector<4x4xf32>
    %cst_6 = arith.constant dense<0.000000e+00> : vector<4x256xf32>
    %10 = tpu.matmul %9, %8, %cst_6 {dimension_numbers = #tpu.dot_dimension_numbers<[1], [0], [0], [1], [0, 0, 1, 1], [], []>} : vector<4x4xf32>, vector<4x256xf32>, vector<4x256xf32> -> vector<4x256xf32>
    %c0_7 = arith.constant 0 : index
    %c0_8 = arith.constant 0 : index
    %11 = vector.load %arg4[%c0_7, %c0_8] : memref<4x1xf32, #tpu.memory_space<vmem>>, vector<4x1xf32>
    %cst_9 = arith.constant dense<0.000000e+00> : vector<4xf32>
    %12 = vector.multi_reduction <add>, %10, %cst_9 [1] : vector<4x256xf32> to vector<4xf32>
    %13 = vector.shape_cast %12 : vector<4xf32> to vector<4x1xf32>
    %14 = arith.addf %11, %13 : vector<4x1xf32>
    %c0_10 = arith.constant 0 : index
    %c0_11 = arith.constant 0 : index
    %15 = vector.load %arg4[%c0_10, %c0_11] : memref<4x1xf32, #tpu.memory_space<vmem>>, vector<4x1xf32>
    tpu.vector_store %arg4[%c0_10, %c0_11], %14 {strides = array<i32>} : memref<4x1xf32, #tpu.memory_space<vmem>>, vector<4x1xf32>,
    %c0_12 = arith.constant 0 : index
    %c0_13 = arith.constant 0 : index
    %16 = vector.load %arg5[%c0_12, %c0_13] : memref<4x1xf32, #tpu.memory_space<vmem>>, vector<4x1xf32>
    %17 = arith.mulf %10, %10 : vector<4x256xf32>
    %cst_14 = arith.constant dense<0.000000e+00> : vector<4xf32>
    %18 = vector.multi_reduction <add>, %17, %cst_14 [1] : vector<4x256xf32> to vector<4xf32>
    %19 = vector.shape_cast %18 : vector<4xf32> to vector<4x1xf32>
    %20 = arith.addf %16, %19 : vector<4x1xf32>
    %c0_15 = arith.constant 0 : index
    %c0_16 = arith.constant 0 : index
    %21 = vector.load %arg5[%c0_15, %c0_16] : memref<4x1xf32, #tpu.memory_space<vmem>>, vector<4x1xf32>
    tpu.vector_store %arg5[%c0_15, %c0_16], %20 {strides = array<i32>} : memref<4x1xf32, #tpu.memory_space<vmem>>, vector<4x1xf32>,
    return
  }
  func.func @transform_0(%arg0: i32, %arg1: i32) -> (i32, i32, i32) {
    %c0_i32 = arith.constant 0 : i32
    %c0_i32_0 = arith.constant 0 : i32
    return %arg0, %c0_i32, %arg1 : i32, i32, i32
  }
  func.func @transform_1(%arg0: i32, %arg1: i32) -> (i32, i32) {
    %c0_i32 = arith.constant 0 : i32
    %c0_i32_0 = arith.constant 0 : i32
    %c0_i32_1 = arith.constant 0 : i32
    return %c0_i32, %c0_i32_0 : i32, i32
  }
  func.func @transform_2(%arg0: i32, %arg1: i32) -> (i32, i32) {
    %c0_i32 = arith.constant 0 : i32
    %c0_i32_0 = arith.constant 0 : i32
    %c0_i32_1 = arith.constant 0 : i32
    return %c0_i32, %c0_i32_0 : i32, i32
  }
  func.func @transform_3(%arg0: i32, %arg1: i32) -> (i32, i32) {
    %c0_i32 = arith.constant 0 : i32
    %c0_i32_0 = arith.constant 0 : i32
    %c0_i32_1 = arith.constant 0 : i32
    return %c0_i32, %c0_i32_0 : i32, i32
  }
}

module attributes {stable_mosaic.version = 11 : i64} {
  func.func @_apply1_kernel(%arg0: i32, %arg1: i32, %arg2: memref<1x4x256xf32, #tpu.memory_space<vmem>>, %arg3: memref<4x4xf32, #tpu.memory_space<vmem>>, %arg4: memref<4x1xf32, #tpu.memory_space<vmem>>, %arg5: memref<4x1xf32, #tpu.memory_space<vmem>>, %arg6: memref<4x4xf32, #tpu.memory_space<vmem>>, %arg7: memref<1x4x256xf32, #tpu.memory_space<vmem>>, %arg8: memref<4x1xf32, #tpu.memory_space<vmem>>, %arg9: memref<4x1xf32, #tpu.memory_space<vmem>>) attributes {dimension_semantics = [#tpu.dimension_semantics<arbitrary>, #tpu.dimension_semantics<arbitrary>], iteration_bounds = array<i64: 2, 1>, scalar_prefetch = 0 : i64, scratch_operands = 0 : i64, tpu.core_type = #tpu.core_type<tc>, window_params = [{transform_indices = @transform_0, window_bounds = array<i64: 1, 4, 256>}, {pipeline_mode = #tpu.pipeline_mode<synchronous>, transform_indices = @transform_1, window_bounds = array<i64: 4, 4>}, {pipeline_mode = #tpu.pipeline_mode<synchronous>, transform_indices = @transform_2, window_bounds = array<i64: 4, 1>}, {pipeline_mode = #tpu.pipeline_mode<synchronous>, transform_indices = @transform_3, window_bounds = array<i64: 4, 1>}, {pipeline_mode = #tpu.pipeline_mode<synchronous>, transform_indices = @transform_4, window_bounds = array<i64: 4, 4>}, {transform_indices = @transform_5, window_bounds = array<i64: 1, 4, 256>}, {pipeline_mode = #tpu.pipeline_mode<synchronous>, transform_indices = @transform_6, window_bounds = array<i64: 4, 1>}, {pipeline_mode = #tpu.pipeline_mode<synchronous>, transform_indices = @transform_7, window_bounds = array<i64: 4, 1>}]} {
    %c0_i32 = arith.constant 0 : i32
    %0 = arith.cmpi eq, %arg0, %c0_i32 : i32
    %c0_i32_0 = arith.constant 0 : i32
    %1 = arith.cmpi eq, %arg1, %c0_i32_0 : i32
    %2 = arith.andi %0, %1 : i1
    %3 = arith.extui %2 : i1 to i32
    %c0_i32_1 = arith.constant 0 : i32
    %4 = arith.cmpi ne, %3, %c0_i32_1 : i32
    scf.if %4 {
      %cst_28 = arith.constant 0.000000e+00 : f32
      %35 = vector.broadcast %cst_28 : f32 to vector<4x1xf32>
      %c0_29 = arith.constant 0 : index
      %c0_30 = arith.constant 0 : index
      %36 = vector.load %arg8[%c0_29, %c0_30] : memref<4x1xf32, #tpu.memory_space<vmem>>, vector<4x1xf32>
      tpu.vector_store %arg8[%c0_29, %c0_30], %35 {strides = array<i32>} : memref<4x1xf32, #tpu.memory_space<vmem>>, vector<4x1xf32>,
      %cst_31 = arith.constant 0.000000e+00 : f32
      %37 = vector.broadcast %cst_31 : f32 to vector<4x1xf32>
      %c0_32 = arith.constant 0 : index
      %c0_33 = arith.constant 0 : index
      %38 = vector.load %arg9[%c0_32, %c0_33] : memref<4x1xf32, #tpu.memory_space<vmem>>, vector<4x1xf32>
      tpu.vector_store %arg9[%c0_32, %c0_33], %37 {strides = array<i32>} : memref<4x1xf32, #tpu.memory_space<vmem>>, vector<4x1xf32>,
    } else {
    }
    %c0 = arith.constant 0 : index
    %c0_2 = arith.constant 0 : index
    %c0_3 = arith.constant 0 : index
    %5 = vector.load %arg2[%c0, %c0_2, %c0_3] : memref<1x4x256xf32, #tpu.memory_space<vmem>>, vector<1x4x256xf32>
    %6 = vector.shape_cast %5 : vector<1x4x256xf32> to vector<4x256xf32>
    %cst = arith.constant 0.000000e+00 : f32
    %7 = vector.broadcast %cst : f32 to vector<4x256xf32>
    %8 = arith.maximumf %6, %7 : vector<4x256xf32>
    %c0_4 = arith.constant 0 : index
    %c0_5 = arith.constant 0 : index
    %9 = vector.load %arg3[%c0_4, %c0_5] : memref<4x4xf32, #tpu.memory_space<vmem>>, vector<4x4xf32>
    %cst_6 = arith.constant dense<0.000000e+00> : vector<4x256xf32>
    %10 = tpu.matmul %9, %8, %cst_6 {dimension_numbers = #tpu.dot_dimension_numbers<[1], [0], [0], [1], [0, 0, 1, 1], [], []>} : vector<4x4xf32>, vector<4x256xf32>, vector<4x256xf32> -> vector<4x256xf32>
    %c0_7 = arith.constant 0 : index
    %c0_8 = arith.constant 0 : index
    %11 = vector.load %arg4[%c0_7, %c0_8] : memref<4x1xf32, #tpu.memory_space<vmem>>, vector<4x1xf32>
    %12 = vector.broadcast %11 : vector<4x1xf32> to vector<4x256xf32>
    %13 = arith.mulf %10, %12 : vector<4x256xf32>
    %c0_9 = arith.constant 0 : index
    %c0_10 = arith.constant 0 : index
    %14 = vector.load %arg5[%c0_9, %c0_10] : memref<4x1xf32, #tpu.memory_space<vmem>>, vector<4x1xf32>
    %15 = vector.broadcast %14 : vector<4x1xf32> to vector<4x256xf32>
    %16 = arith.addf %13, %15 : vector<4x256xf32>
    %cst_11 = arith.constant 0.000000e+00 : f32
    %17 = vector.broadcast %cst_11 : f32 to vector<4x256xf32>
    %18 = arith.maximumf %16, %17 : vector<4x256xf32>
    %c0_12 = arith.constant 0 : index
    %c0_13 = arith.constant 0 : index
    %19 = vector.load %arg6[%c0_12, %c0_13] : memref<4x4xf32, #tpu.memory_space<vmem>>, vector<4x4xf32>
    %cst_14 = arith.constant dense<0.000000e+00> : vector<4x256xf32>
    %20 = tpu.matmul %19, %18, %cst_14 {dimension_numbers = #tpu.dot_dimension_numbers<[1], [0], [0], [1], [0, 0, 1, 1], [], []>} : vector<4x4xf32>, vector<4x256xf32>, vector<4x256xf32> -> vector<4x256xf32>
    %c0_15 = arith.constant 0 : index
    %c0_16 = arith.constant 0 : index
    %c0_17 = arith.constant 0 : index
    %21 = vector.load %arg7[%c0_15, %c0_16, %c0_17] : memref<1x4x256xf32, #tpu.memory_space<vmem>>, vector<1x4x256xf32>
    %22 = vector.shape_cast %21 : vector<1x4x256xf32> to vector<4x256xf32>
    %23 = vector.shape_cast %20 : vector<4x256xf32> to vector<1x4x256xf32>
    tpu.vector_store %arg7[%c0_15, %c0_16, %c0_17], %23 {strides = array<i32>} : memref<1x4x256xf32, #tpu.memory_space<vmem>>, vector<1x4x256xf32>,
    %c0_18 = arith.constant 0 : index
    %c0_19 = arith.constant 0 : index
    %24 = vector.load %arg8[%c0_18, %c0_19] : memref<4x1xf32, #tpu.memory_space<vmem>>, vector<4x1xf32>
    %cst_20 = arith.constant dense<0.000000e+00> : vector<4xf32>
    %25 = vector.multi_reduction <add>, %20, %cst_20 [1] : vector<4x256xf32> to vector<4xf32>
    %26 = vector.shape_cast %25 : vector<4xf32> to vector<4x1xf32>
    %27 = arith.addf %24, %26 : vector<4x1xf32>
    %c0_21 = arith.constant 0 : index
    %c0_22 = arith.constant 0 : index
    %28 = vector.load %arg8[%c0_21, %c0_22] : memref<4x1xf32, #tpu.memory_space<vmem>>, vector<4x1xf32>
    tpu.vector_store %arg8[%c0_21, %c0_22], %27 {strides = array<i32>} : memref<4x1xf32, #tpu.memory_space<vmem>>, vector<4x1xf32>,
    %c0_23 = arith.constant 0 : index
    %c0_24 = arith.constant 0 : index
    %29 = vector.load %arg9[%c0_23, %c0_24] : memref<4x1xf32, #tpu.memory_space<vmem>>, vector<4x1xf32>
    %30 = arith.mulf %20, %20 : vector<4x256xf32>
    %cst_25 = arith.constant dense<0.000000e+00> : vector<4xf32>
    %31 = vector.multi_reduction <add>, %30, %cst_25 [1] : vector<4x256xf32> to vector<4xf32>
    %32 = vector.shape_cast %31 : vector<4xf32> to vector<4x1xf32>
    %33 = arith.addf %29, %32 : vector<4x1xf32>
    %c0_26 = arith.constant 0 : index
    %c0_27 = arith.constant 0 : index
    %34 = vector.load %arg9[%c0_26, %c0_27] : memref<4x1xf32, #tpu.memory_space<vmem>>, vector<4x1xf32>
    tpu.vector_store %arg9[%c0_26, %c0_27], %33 {strides = array<i32>} : memref<4x1xf32, #tpu.memory_space<vmem>>, vector<4x1xf32>,
    return
  }
  func.func @transform_0(%arg0: i32, %arg1: i32) -> (i32, i32, i32) {
    %c0_i32 = arith.constant 0 : i32
    %c0_i32_0 = arith.constant 0 : i32
    return %arg0, %c0_i32, %arg1 : i32, i32, i32
  }
  func.func @transform_1(%arg0: i32, %arg1: i32) -> (i32, i32) {
    %c0_i32 = arith.constant 0 : i32
    %c0_i32_0 = arith.constant 0 : i32
    %c0_i32_1 = arith.constant 0 : i32
    return %c0_i32, %c0_i32_0 : i32, i32
  }
  func.func @transform_2(%arg0: i32, %arg1: i32) -> (i32, i32) {
    %c0_i32 = arith.constant 0 : i32
    %c0_i32_0 = arith.constant 0 : i32
    %c0_i32_1 = arith.constant 0 : i32
    return %c0_i32, %c0_i32_0 : i32, i32
  }
  func.func @transform_3(%arg0: i32, %arg1: i32) -> (i32, i32) {
    %c0_i32 = arith.constant 0 : i32
    %c0_i32_0 = arith.constant 0 : i32
    %c0_i32_1 = arith.constant 0 : i32
    return %c0_i32, %c0_i32_0 : i32, i32
  }
  func.func @transform_4(%arg0: i32, %arg1: i32) -> (i32, i32) {
    %c0_i32 = arith.constant 0 : i32
    %c0_i32_0 = arith.constant 0 : i32
    %c0_i32_1 = arith.constant 0 : i32
    return %c0_i32, %c0_i32_0 : i32, i32
  }
  func.func @transform_5(%arg0: i32, %arg1: i32) -> (i32, i32, i32) {
    %c0_i32 = arith.constant 0 : i32
    %c0_i32_0 = arith.constant 0 : i32
    return %arg0, %c0_i32, %arg1 : i32, i32, i32
  }
  func.func @transform_6(%arg0: i32, %arg1: i32) -> (i32, i32) {
    %c0_i32 = arith.constant 0 : i32
    %c0_i32_0 = arith.constant 0 : i32
    %c0_i32_1 = arith.constant 0 : i32
    return %c0_i32, %c0_i32_0 : i32, i32
  }
  func.func @transform_7(%arg0: i32, %arg1: i32) -> (i32, i32) {
    %c0_i32 = arith.constant 0 : i32
    %c0_i32_0 = arith.constant 0 : i32
    %c0_i32_1 = arith.constant 0 : i32
    return %c0_i32, %c0_i32_0 : i32, i32
  }
}

module attributes {stable_mosaic.version = 11 : i64} {
  func.func @_apply2_kernel(%arg0: i32, %arg1: i32, %arg2: memref<1x4x256xf32, #tpu.memory_space<vmem>>, %arg3: memref<1x4x256xf32, #tpu.memory_space<vmem>>, %arg4: memref<4x1xf32, #tpu.memory_space<vmem>>, %arg5: memref<4x1xf32, #tpu.memory_space<vmem>>, %arg6: memref<1x4x256xf32, #tpu.memory_space<vmem>>) attributes {dimension_semantics = [#tpu.dimension_semantics<parallel>, #tpu.dimension_semantics<parallel>], iteration_bounds = array<i64: 2, 1>, scalar_prefetch = 0 : i64, scratch_operands = 0 : i64, tpu.core_type = #tpu.core_type<tc>, window_params = [{transform_indices = @transform_0, window_bounds = array<i64: 1, 4, 256>}, {transform_indices = @transform_1, window_bounds = array<i64: 1, 4, 256>}, {pipeline_mode = #tpu.pipeline_mode<synchronous>, transform_indices = @transform_2, window_bounds = array<i64: 4, 1>}, {pipeline_mode = #tpu.pipeline_mode<synchronous>, transform_indices = @transform_3, window_bounds = array<i64: 4, 1>}, {transform_indices = @transform_4, window_bounds = array<i64: 1, 4, 256>}]} {
    %c0 = arith.constant 0 : index
    %c0_0 = arith.constant 0 : index
    %c0_1 = arith.constant 0 : index
    %0 = vector.load %arg2[%c0, %c0_0, %c0_1] : memref<1x4x256xf32, #tpu.memory_space<vmem>>, vector<1x4x256xf32>
    %1 = vector.shape_cast %0 : vector<1x4x256xf32> to vector<4x256xf32>
    %c0_2 = arith.constant 0 : index
    %c0_3 = arith.constant 0 : index
    %c0_4 = arith.constant 0 : index
    %2 = vector.load %arg3[%c0_2, %c0_3, %c0_4] : memref<1x4x256xf32, #tpu.memory_space<vmem>>, vector<1x4x256xf32>
    %3 = vector.shape_cast %2 : vector<1x4x256xf32> to vector<4x256xf32>
    %c0_5 = arith.constant 0 : index
    %c0_6 = arith.constant 0 : index
    %4 = vector.load %arg4[%c0_5, %c0_6] : memref<4x1xf32, #tpu.memory_space<vmem>>, vector<4x1xf32>
    %5 = vector.broadcast %4 : vector<4x1xf32> to vector<4x256xf32>
    %6 = arith.mulf %3, %5 : vector<4x256xf32>
    %7 = arith.addf %1, %6 : vector<4x256xf32>
    %c0_7 = arith.constant 0 : index
    %c0_8 = arith.constant 0 : index
    %8 = vector.load %arg5[%c0_7, %c0_8] : memref<4x1xf32, #tpu.memory_space<vmem>>, vector<4x1xf32>
    %9 = vector.broadcast %8 : vector<4x1xf32> to vector<4x256xf32>
    %10 = arith.addf %7, %9 : vector<4x256xf32>
    %c0_9 = arith.constant 0 : index
    %c0_10 = arith.constant 0 : index
    %c0_11 = arith.constant 0 : index
    %11 = vector.load %arg6[%c0_9, %c0_10, %c0_11] : memref<1x4x256xf32, #tpu.memory_space<vmem>>, vector<1x4x256xf32>
    %12 = vector.shape_cast %11 : vector<1x4x256xf32> to vector<4x256xf32>
    %13 = vector.shape_cast %10 : vector<4x256xf32> to vector<1x4x256xf32>
    tpu.vector_store %arg6[%c0_9, %c0_10, %c0_11], %13 {strides = array<i32>} : memref<1x4x256xf32, #tpu.memory_space<vmem>>, vector<1x4x256xf32>,
    return
  }
  func.func @transform_0(%arg0: i32, %arg1: i32) -> (i32, i32, i32) {
    %c0_i32 = arith.constant 0 : i32
    %c0_i32_0 = arith.constant 0 : i32
    return %arg0, %c0_i32, %arg1 : i32, i32, i32
  }
  func.func @transform_1(%arg0: i32, %arg1: i32) -> (i32, i32, i32) {
    %c0_i32 = arith.constant 0 : i32
    %c0_i32_0 = arith.constant 0 : i32
    return %arg0, %c0_i32, %arg1 : i32, i32, i32
  }
  func.func @transform_2(%arg0: i32, %arg1: i32) -> (i32, i32) {
    %c0_i32 = arith.constant 0 : i32
    %c0_i32_0 = arith.constant 0 : i32
    %c0_i32_1 = arith.constant 0 : i32
    return %c0_i32, %c0_i32_0 : i32, i32
  }
  func.func @transform_3(%arg0: i32, %arg1: i32) -> (i32, i32) {
    %c0_i32 = arith.constant 0 : i32
    %c0_i32_0 = arith.constant 0 : i32
    %c0_i32_1 = arith.constant 0 : i32
    return %c0_i32, %c0_i32_0 : i32, i32
  }
  func.func @transform_4(%arg0: i32, %arg1: i32) -> (i32, i32, i32) {
    %c0_i32 = arith.constant 0 : i32
    %c0_i32_0 = arith.constant 0 : i32
    return %arg0, %c0_i32, %arg1 : i32, i32, i32
  }
}

</mosaic_0001>

<llo_original>
// kernel: resblock_pallas.3
$region0: #{resblock_pallas.3}
  #allocation0 [shape = 'u32[]', space=smem, size = 0x4, offset = 0x4, fixed_abs, tag = 'smem constant byte address 0x4 - core index']
  #allocation1 [shape = 'u32[144,128]{1,0:T(1,128)}', space=vmem, size = 0x12000, scoped, tag = 'internal scratch']
  %s0 = inlined_call_operand.vmem [shape: f32[2,4,256], index: 0, kind: input, shape index: {}]
  %s1 = inlined_call_operand.vmem [shape: f32[4,4], index: 1, kind: input, shape index: {}]
  %s2 = inlined_call_operand.vmem [shape: f32[4,1], index: 2, kind: output, shape index: {0}]
  %s3 = inlined_call_operand.vmem [shape: f32[4,1], index: 3, kind: output, shape index: {1}]
  %4 = xla_tuple %s2, %s3
  %s5 = sld [smem:[#allocation0]]
  $region53: #{resblock_pallas.3} parent=0
    _
  %s7 = ssub.s32 1, %s5
  %s8 = scalar_select 0, %s7, %s5
  loop: start=0, step=1, limit=4
  $region2: #{resblock_pallas.3} parent=0 // loop_pre_header
    _
  $region3: #{resblock_pallas.3} parent=0 // loop_header
    %s10 = sphi 0, %s14
    %p11 = scmp.ge.s32.totalorder %s10, 4
    %s17 = sphi 0, %s29
    %s18 = sphi 0, %s25
    %s19 = sphi 0, %s17
    %s20 = sphi 0, %s18
    %s21 = sphi 0, %s19
    %s22 = sphi 0, %s20
    %s34 = sphi 0, %s36
    %s37 = sphi 0, %s34
    %s38 = sphi 0, %s37
    %s54 = sphi 0, %s38
    %s58 = sphi 0, %s58
    %s60 = sphi 0, %s58
    %s61 = sphi 0, %s60
    %s75 = sphi 0, %s61
    %s79 = sphi 0, %s79
    %s81 = sphi 0, %s79
    %s82 = sphi 0, %s81
    %s96 = sphi 0, %s82
    %s100 = sphi 0, %s100
    %s102 = sphi 0, %s100
    %s103 = sphi 0, %s102
    %s117 = sphi 0, %s103
  $region4: #{resblock_pallas.3} parent=0 // loop_header_branch
    %13 = sbr.rel (%p11) target = $region8
  $region5: #{resblock_pallas.3} parent=0 // loop_body
    %s15 = ssub.s32 %s10, 1
    %s16 = ssub.s32 %s10, 2
    %s23 = sadd.s32 1, %s18
    %p24 = scmp.ge.s32.totalorder %s23, 1
    %s25 = scalar_select %p24, 0, %s23
    %s26 = sadd.s32 1, %s17
    %s27 = scalar_select %p24, %s26, %s17
    %p28 = scmp.ge.s32.totalorder %s27, 2
    %s29 = scalar_select %p28, 0, %s27
    %s30 = ssub.s32 %s17, %s29
    %s31 = ssub.s32 %s18, %s25
    %s32 = sor.u32 %s30, %s31
    %p33 = scmp.eq.s32.totalorder %s32, 0
    %s35 = sadd.s32 %s34, 1
    %s36 = scalar_select %p33, %s34, %s35
    %p39 = pneg %p33
    %p40 = scmp.eq.s32.totalorder %s10, 1
    %p41 = por %p39, %p40
    %p42 = scmp.ne.s32.totalorder %s34, %s37
    %p43 = scmp.eq.s32.totalorder %s10, 0
    %p44 = por %p42, %p43
    %p45 = scmp.ne.s32.totalorder %s34, %s37
    %p46 = scmp.eq.s32.totalorder %s15, 1
    %p47 = por %p45, %p46
    %p48 = scmp.ne.s32.totalorder %s37, %s38
    %p49 = scmp.eq.s32.totalorder %s15, 0
    %p50 = por %p48, %p49
    %p51 = scmp.ne.s32.totalorder %s37, %s38
    %p52 = scmp.eq.s32.totalorder %s16, 1
    %p53 = por %p51, %p52
    %p55 = scmp.ne.s32.totalorder %s38, %s54
    %p56 = scmp.eq.s32.totalorder %s16, 0
    %p57 = por %p55, %p56
    %s59 = sadd.s32 %s58, 1
    %p62 = scmp.eq.s32.totalorder %s10, 1
    %p63 = scmp.ne.s32.totalorder %s58, %s60
    %p64 = scmp.eq.s32.totalorder %s10, 0
    %p65 = por %p63, %p64
    %p66 = scmp.ne.s32.totalorder %s58, %s60
    %p67 = scmp.eq.s32.totalorder %s15, 1
    %p68 = por %p66, %p67
    %p69 = scmp.ne.s32.totalorder %s60, %s61
    %p70 = scmp.eq.s32.totalorder %s15, 0
    %p71 = por %p69, %p70
    %p72 = scmp.ne.s32.totalorder %s60, %s61
    %p73 = scmp.eq.s32.totalorder %s16, 1
    %p74 = por %p72, %p73
    %p76 = scmp.ne.s32.totalorder %s61, %s75
    %p77 = scmp.eq.s32.totalorder %s16, 0
    %p78 = por %p76, %p77
    %s80 = sadd.s32 %s79, 1
    %p83 = scmp.eq.s32.totalorder %s10, 1
    %p84 = scmp.ne.s32.totalorder %s79, %s81
    %p85 = scmp.eq.s32.totalorder %s10, 0
    %p86 = por %p84, %p85
    %p87 = scmp.ne.s32.totalorder %s79, %s81
    %p88 = scmp.eq.s32.totalorder %s15, 1
    %p89 = por %p87, %p88
    %p90 = scmp.ne.s32.totalorder %s81, %s82
    %p91 = scmp.eq.s32.totalorder %s15, 0
    %p92 = por %p90, %p91
    %p93 = scmp.ne.s32.totalorder %s81, %s82
    %p94 = scmp.eq.s32.totalorder %s16, 1
    %p95 = por %p93, %p94
    %p97 = scmp.ne.s32.totalorder %s82, %s96
    %p98 = scmp.eq.s32.totalorder %s16, 0
    %p99 = por %p97, %p98
    %s101 = sadd.s32 %s100, 1
    %p104 = scmp.eq.s32.totalorder %s10, 1
    %p105 = scmp.ne.s32.totalorder %s100, %s102
    %p106 = scmp.eq.s32.totalorder %s10, 0
    %p107 = por %p105, %p106
    %p108 = scmp.ne.s32.totalorder %s100, %s102
    %p109 = scmp.eq.s32.totalorder %s15, 1
    %p110 = por %p108, %p109
    %p111 = scmp.ne.s32.totalorder %s102, %s103
    %p112 = scmp.eq.s32.totalorder %s15, 0
    %p113 = por %p111, %p112
    %p114 = scmp.ne.s32.totalorder %s102, %s103
    %p115 = scmp.eq.s32.totalorder %s16, 1
    %p116 = por %p114, %p115
    %p118 = scmp.ne.s32.totalorder %s103, %s117
    %p119 = scmp.eq.s32.totalorder %s16, 0
    %p120 = por %p118, %p119
    %p121 = scmp.le.s32.totalorder 1, %s10
    %p122 = scmp.lt.s32.totalorder %s10, 3
    %p123 = pnand %p121, %p122
    %p124 = pneg %p123
    // Predicated region
    $region9: #{resblock_pallas.3} parent=5 // pred_check
      _
    $region10: #{resblock_pallas.3} parent=5 // pred_check_branch
      %126 = sbr.rel (%p123) target = $region12
    $region11: #{resblock_pallas.3} parent=5 // pred_region
      %s127 = ssub.s32 %s10, 1
      // Predicated region
      $region13: #{resblock_pallas.3} parent=11 // pred_check
        %p128 = pneg %p71
      $region14: #{resblock_pallas.3} parent=11 // pred_check_branch
        %130 = sbr.rel (%p128) target = $region16
      $region15: #{resblock_pallas.3} parent=11 // pred_region
        _
      $region16: #{resblock_pallas.3} parent=11 // pred_fallthru
        _
    $region12: #{resblock_pallas.3} parent=5 // pred_fallthru
      _
    %p131 = scmp.lt.s32.totalorder %s10, 2
    // Predicated region
    $region17: #{resblock_pallas.3} parent=5 // pred_check
      %p132 = pneg %p131
    $region18: #{resblock_pallas.3} parent=5 // pred_check_branch
      %134 = sbr.rel (%p132) target = $region20
    $region19: #{resblock_pallas.3} parent=5 // pred_region
      // Predicated region
      $region21: #{resblock_pallas.3} parent=19 // pred_check
        %p135 = pneg %p44
      $region22: #{resblock_pallas.3} parent=19 // pred_check_branch
        %137 = sbr.rel (%p135) target = $region24
      $region23: #{resblock_pallas.3} parent=19 // pred_region
        %s138 = smul.u32 2, %s18
        %p139 = scmp.lt.s32.totalorder %s17, 1
        %s140 = scalar_select %p139, %s17, 1
        %p141 = scmp.lt.s32.totalorder %s138, 1
        %s142 = scalar_select %p141, %s138, 1
        %s143 = smul.addr %s140, 2
        %s144 = sadd.s32 %s142, %s143
        %s145 = smul.addr %s144, 4
        %s146 = scalar_lea.vmem %s0, %s145
        %s147 = smul.u32 2, %s18
      $region24: #{resblock_pallas.3} parent=19 // pred_fallthru
        _
    $region20: #{resblock_pallas.3} parent=5 // pred_fallthru
      _
    %p148 = scmp.le.s32.totalorder 1, %s10
    %p149 = scmp.lt.s32.totalorder %s10, 3
    %p150 = pnand %p148, %p149
    %p151 = pneg %p150
    // Predicated region
    $region25: #{resblock_pallas.3} parent=5 // pred_check
      _
    $region26: #{resblock_pallas.3} parent=5 // pred_check_branch
      %153 = sbr.rel (%p150) target = $region28
    $region27: #{resblock_pallas.3} parent=5 // pred_region
      %s154 = ssub.s32 %s10, 1
      %s155 = smul.u32 2, %s20
      %p156 = scmp.lt.s32.totalorder %s19, 1
      %s157 = scalar_select %p156, %s19, 1
      %p158 = scmp.lt.s32.totalorder %s155, 1
      %s159 = scalar_select %p158, %s155, 1
      %s160 = smul.addr %s157, 2
      %s161 = sadd.s32 %s159, %s160
      %s162 = smul.addr %s161, 4
      %s163 = scalar_lea.vmem %s0, %s162
      %p164 = pneg %p50
      %p165 = pneg %p47
      %p166 = pneg %p71
      %p167 = pneg %p68
      %p168 = pneg %p92
      %p169 = pneg %p89
      %p170 = pneg %p113
      %p171 = pneg %p110
      %s172 = smul.u32 2, %s20
      %p173 = scmp.lt.s32.totalorder %s19, 1
      %s174 = scalar_select %p173, %s19, 1
      %p175 = scmp.lt.s32.totalorder %s172, 1
      %s176 = scalar_select %p175, %s172, 1
      %s177 = smul.addr %s174, 2
      %s178 = sadd.s32 %s176, %s177
      %s179 = smul.addr %s178, 4
      %s180 = scalar_lea.vmem %s0, %s179
      %s181 = smul.u32 2, %s20
      %p182 = scmp.eq.s32.totalorder %s19, 0
      %p183 = scmp.eq.s32.totalorder %s20, 0
      %p184 = pnand %p182, %p183
      %p185 = pneg %p184
      // Predicated region
      $region29: #{resblock_pallas.3} parent=27 // pred_check
        _
      $region30: #{resblock_pallas.3} parent=27 // pred_check_branch
        %187 = sbr.rel (%p184) target = $region32
      $region31: #{resblock_pallas.3} parent=27 // pred_region
        %vm188 = vcmask 3072
        %189 = vst.msk [vmem:[%s2] sm:$0xf] %vm188, 0.0
        %190 = vst.msk [vmem:[%s3] sm:$0xf] %vm188, 0.0
      $region32: #{resblock_pallas.3} parent=27 // pred_fallthru
        _
      %v191 = vld [vmem:[%s180] sm:$0xff]
      %v192 = vmax.f32 %v191, 0.0
      %v193 = vld [vmem:[%s1] sm:$0xf]
      %v195 = vcombine.high %v192, %v192
      %vm196 = vcmask 31744
      %v198 = vsel %vm196, %v193, 0
      %vm200 = vcmask 1043456
      %v201 = vsel %vm200, %v192, 0
      %v203 = vsel %vm200, %v195, 0
      %205 = vmatprep.subr.mxu0 %v203
      %206 = vmatpush1.msra.mxu0 %v201
      %207 = vmatprep.subr.mxu0 0.0
      %208 = vmatpush1.msra.mxu0 0.0
      %209 = vmatprep.subr.mxu0 0.0
      %210 = vmatpush1.msra.mxu0 0.0
      %211 = vmatprep.subr.mxu0 0.0
      %212 = vmatpush1.msra.mxu0 0.0
      %213 = vmatprep.subr.mxu0 0.0
      %214 = vmatpush1.msra.mxu0 0.0
      %215 = vmatprep.subr.mxu0 0.0
      %216 = vmatpush1.msra.mxu0 0.0
      %217 = vmatprep.subr.mxu0 0.0
      %218 = vmatpush1.msra.mxu0 0.0
      %219 = vmatprep.subr.mxu0 0.0
      %220 = vmatpush1.msra.mxu0 0.0
      %221 = vmatprep.subr.mxu0 0.0
      %222 = vmatpush1.msra.mxu0 0.0
      %223 = vmatprep.subr.mxu0 0.0
      %224 = vmatpush1.msra.mxu0 0.0
      %225 = vmatprep.subr.mxu0 0.0
      %226 = vmatpush1.msra.mxu0 0.0
      %227 = vmatprep.subr.mxu0 0.0
      %228 = vmatpush1.msra.mxu0 0.0
      %229 = vmatprep.subr.mxu0 0.0
      %230 = vmatpush1.msra.mxu0 0.0
      %231 = vmatprep.subr.mxu0 0.0
      %232 = vmatpush1.msra.mxu0 0.0
      %233 = vmatprep.subr.mxu0 0.0
      %234 = vmatpush1.msra.mxu0 0.0
      %235 = vmatprep.subr.mxu0 0.0
      %236 = vmatpush1.msra.mxu0 0.0
      %237 = vmatprep.subr.mxu0 0.0
      %238 = vmatpush1.msra.mxu0 0.0
      %239 = vmatprep.subr.mxu0 0.0
      %240 = vmatpush1.msra.mxu0 0.0
      %241 = vmatprep.subr.mxu0 0.0
      %242 = vmatpush1.msra.mxu0 0.0
      %243 = vmatprep.subr.mxu0 0.0
      %244 = vmatpush1.msra.mxu0 0.0
      %245 = vmatprep.subr.mxu0 0.0
      %246 = vmatpush1.msra.mxu0 0.0
      %247 = vmatprep.subr.mxu0 0.0
      %248 = vmatpush1.msra.mxu0 0.0
      %249 = vmatprep.subr.mxu0 0.0
      %250 = vmatpush1.msra.mxu0 0.0
      %251 = vmatprep.subr.mxu0 0.0
      %252 = vmatpush1.msra.mxu0 0.0
      %253 = vmatprep.subr.mxu0 0.0
      %254 = vmatpush1.msra.mxu0 0.0
      %255 = vmatprep.subr.mxu0 0.0
      %256 = vmatpush1.msra.mxu0 0.0
      %257 = vmatprep.subr.mxu0 0.0
      %258 = vmatpush1.msra.mxu0 0.0
      %259 = vmatprep.subr.mxu0 0.0
      %260 = vmatpush1.msra.mxu0 0.0
      %261 = vmatprep.subr.mxu0 0.0
      %262 = vmatpush1.msra.mxu0 0.0
      %263 = vmatprep.subr.mxu0 0.0
      %264 = vmatpush1.msra.mxu0 0.0
      %265 = vmatprep.subr.mxu0 0.0
      %266 = vmatpush1.msra.mxu0 0.0
      %267 = vmatprep.subr.mxu0 0.0
      %268 = vmatpush1.msra.mxu0 0.0
      %269 = vmatprep.mubr.f32.mxu0 0.0
      %270 = vmatmul.mubr.f32.gmra.mrb[0].mxu0 %v198
      %v271 = vpop.f32.mrb[0].mxu0
      %v272 = vadd.f32 0.0, %v271
      %v273 = vpop.f32.mrb[0].mxu0
      %v274 = vadd.f32 0.0, %v273
      %275 = vdwg.mxu0
      %v276 = vld [vmem:[%s2] sm:$0xf]
      %v277 = vsel %vm200, %v272, 0.0
      %v278 = vsel %vm200, %v274, 0.0
      %v279 = vadd.f32 %v277, %v278
      %280 = vadd.xlane.f32.xlu0 %v279
      %v281 = vpop.xlane.xlu0 %280
      %v282 = vadd.f32 %v276, %v281
      %vm283 = vcmask 3072
      %284 = vst.msk [vmem:[%s2] sm:$0xf] %vm283, %v282
      %v285 = vld [vmem:[%s3] sm:$0xf]
      %v286 = vmul.f32 %v272, %v272
      %v287 = vmul.f32 %v274, %v274
      %v288 = vsel %vm200, %v286, 0.0
      %v289 = vsel %vm200, %v287, 0.0
      %v290 = vadd.f32 %v288, %v289
      %291 = vadd.xlane.f32.xlu0 %v290
      %v292 = vpop.xlane.xlu0 %291
      %v293 = vadd.f32 %v285, %v292
      %294 = vst.msk [vmem:[%s3] sm:$0xf] %vm283, %v293
      // Predicated region
      $region33: #{resblock_pallas.3} parent=27 // pred_check
        %p295 = pneg %p89
      $region34: #{resblock_pallas.3} parent=27 // pred_check_branch
        %297 = sbr.rel (%p295) target = $region36
      $region35: #{resblock_pallas.3} parent=27 // pred_region
        _
      $region36: #{resblock_pallas.3} parent=27 // pred_fallthru
        _
      // Predicated region
      $region37: #{resblock_pallas.3} parent=27 // pred_check
        %p298 = pneg %p110
      $region38: #{resblock_pallas.3} parent=27 // pred_check_branch
        %300 = sbr.rel (%p298) target = $region40
      $region39: #{resblock_pallas.3} parent=27 // pred_region
        _
      $region40: #{resblock_pallas.3} parent=27 // pred_fallthru
        _
      // Predicated region
      $region41: #{resblock_pallas.3} parent=27 // pred_check
        %p301 = pneg %p89
      $region42: #{resblock_pallas.3} parent=27 // pred_check_branch
        %303 = sbr.rel (%p301) target = $region44
      $region43: #{resblock_pallas.3} parent=27 // pred_region
        _
      $region44: #{resblock_pallas.3} parent=27 // pred_fallthru
        _
      // Predicated region
      $region45: #{resblock_pallas.3} parent=27 // pred_check
        %p304 = pneg %p110
      $region46: #{resblock_pallas.3} parent=27 // pred_check_branch
        %306 = sbr.rel (%p304) target = $region48
      $region47: #{resblock_pallas.3} parent=27 // pred_region
        _
      $region48: #{resblock_pallas.3} parent=27 // pred_fallthru
        _
    $region28: #{resblock_pallas.3} parent=5 // pred_fallthru
      _
    %p307 = scmp.le.s32.totalorder 2, %s10
    // Predicated region
    $region49: #{resblock_pallas.3} parent=5 // pred_check
      %p308 = pneg %p307
    $region50: #{resblock_pallas.3} parent=5 // pred_check_branch
      %310 = sbr.rel (%p308) target = $region52
    $region51: #{resblock_pallas.3} parent=5 // pred_region
      %s311 = ssub.s32 %s10, 2
    $region52: #{resblock_pallas.3} parent=5 // pred_fallthru
      _
  $region6: #{resblock_pallas.3} parent=0 // loop_footer
    %s14 = sadd.s32 1, %s10
  $region7: #{resblock_pallas.3} parent=0 // loop_footer_branch
    %9 = sbr.rel target = $region3
  $region8: #{resblock_pallas.3} parent=0 // loop_exit
    _

// kernel: resblock_pallas.5
$region0: #{resblock_pallas.5}
  #allocation0 [shape = 'u32[]', space=smem, size = 0x4, offset = 0x4, fixed_abs, tag = 'smem constant byte address 0x4 - core index']
  #allocation1 [shape = 'u32[144,128]{1,0:T(1,128)}', space=vmem, size = 0x12000, scoped, tag = 'internal scratch']
  %s0 = inlined_call_operand.vmem [shape: f32[2,4,256], index: 0, kind: input, shape index: {}]
  %s1 = inlined_call_operand.vmem [shape: f32[2,4,256], index: 1, kind: input, shape index: {}, may-alias: {1,4}]
  %s2 = inlined_call_operand.vmem [shape: f32[4,1], index: 2, kind: input, shape index: {}]
  %s3 = inlined_call_operand.vmem [shape: f32[4,1], index: 3, kind: input, shape index: {}]
  %s4 = inlined_call_operand.vmem [shape: f32[2,4,256], index: 4, kind: output, shape index: {}, may-alias: {1,4}]
  %s5 = sld [smem:[#allocation0]]
  $region49: #{resblock_pallas.5} parent=0
    _
  %s7 = ssub.s32 1, %s5
  %s8 = scalar_select 0, %s7, %s5
  loop: start=0, step=1, limit=4
  $region2: #{resblock_pallas.5} parent=0 // loop_pre_header
    _
  $region3: #{resblock_pallas.5} parent=0 // loop_header
    %s10 = sphi 0, %s14
    %p11 = scmp.ge.s32.totalorder %s10, 4
    %s17 = sphi 0, %s29
    %s18 = sphi 0, %s25
    %s19 = sphi 0, %s17
    %s20 = sphi 0, %s18
    %s21 = sphi 0, %s19
    %s22 = sphi 0, %s20
    %s34 = sphi 0, %s36
    %s37 = sphi 0, %s34
    %s38 = sphi 0, %s37
    %s54 = sphi 0, %s38
    %s62 = sphi 0, %s64
    %s65 = sphi 0, %s62
    %s66 = sphi 0, %s65
    %s82 = sphi 0, %s66
    %s86 = sphi 0, %s86
    %s88 = sphi 0, %s86
    %s89 = sphi 0, %s88
    %s103 = sphi 0, %s89
    %s107 = sphi 0, %s107
    %s109 = sphi 0, %s107
    %s110 = sphi 0, %s109
    %s124 = sphi 0, %s110
    %s132 = sphi 0, %s134
    %s135 = sphi 0, %s132
    %s136 = sphi 0, %s135
    %s152 = sphi 0, %s136
  $region4: #{resblock_pallas.5} parent=0 // loop_header_branch
    %13 = sbr.rel (%p11) target = $region8
  $region5: #{resblock_pallas.5} parent=0 // loop_body
    %s15 = ssub.s32 %s10, 1
    %s16 = ssub.s32 %s10, 2
    %s23 = sadd.s32 1, %s18
    %p24 = scmp.ge.s32.totalorder %s23, 1
    %s25 = scalar_select %p24, 0, %s23
    %s26 = sadd.s32 1, %s17
    %s27 = scalar_select %p24, %s26, %s17
    %p28 = scmp.ge.s32.totalorder %s27, 2
    %s29 = scalar_select %p28, 0, %s27
    %s30 = ssub.s32 %s17, %s29
    %s31 = ssub.s32 %s18, %s25
    %s32 = sor.u32 %s30, %s31
    %p33 = scmp.eq.s32.totalorder %s32, 0
    %s35 = sadd.s32 %s34, 1
    %s36 = scalar_select %p33, %s34, %s35
    %p39 = pneg %p33
    %p40 = scmp.eq.s32.totalorder %s10, 1
    %p41 = por %p39, %p40
    %p42 = scmp.ne.s32.totalorder %s34, %s37
    %p43 = scmp.eq.s32.totalorder %s10, 0
    %p44 = por %p42, %p43
    %p45 = scmp.ne.s32.totalorder %s34, %s37
    %p46 = scmp.eq.s32.totalorder %s15, 1
    %p47 = por %p45, %p46
    %p48 = scmp.ne.s32.totalorder %s37, %s38
    %p49 = scmp.eq.s32.totalorder %s15, 0
    %p50 = por %p48, %p49
    %p51 = scmp.ne.s32.totalorder %s37, %s38
    %p52 = scmp.eq.s32.totalorder %s16, 1
    %p53 = por %p51, %p52
    %p55 = scmp.ne.s32.totalorder %s38, %s54
    %p56 = scmp.eq.s32.totalorder %s16, 0
    %p57 = por %p55, %p56
    %s58 = ssub.s32 %s17, %s29
    %s59 = ssub.s32 %s18, %s25
    %s60 = sor.u32 %s58, %s59
    %p61 = scmp.eq.s32.totalorder %s60, 0
    %s63 = sadd.s32 %s62, 1
    %s64 = scalar_select %p61, %s62, %s63
    %p67 = pneg %p61
    %p68 = scmp.eq.s32.totalorder %s10, 1
    %p69 = por %p67, %p68
    %p70 = scmp.ne.s32.totalorder %s62, %s65
    %p71 = scmp.eq.s32.totalorder %s10, 0
    %p72 = por %p70, %p71
    %p73 = scmp.ne.s32.totalorder %s62, %s65
    %p74 = scmp.eq.s32.totalorder %s15, 1
    %p75 = por %p73, %p74
    %p76 = scmp.ne.s32.totalorder %s65, %s66
    %p77 = scmp.eq.s32.totalorder %s15, 0
    %p78 = por %p76, %p77
    %p79 = scmp.ne.s32.totalorder %s65, %s66
    %p80 = scmp.eq.s32.totalorder %s16, 1
    %p81 = por %p79, %p80
    %p83 = scmp.ne.s32.totalorder %s66, %s82
    %p84 = scmp.eq.s32.totalorder %s16, 0
    %p85 = por %p83, %p84
    %s87 = sadd.s32 %s86, 1
    %p90 = scmp.eq.s32.totalorder %s10, 1
    %p91 = scmp.ne.s32.totalorder %s86, %s88
    %p92 = scmp.eq.s32.totalorder %s10, 0
    %p93 = por %p91, %p92
    %p94 = scmp.ne.s32.totalorder %s86, %s88
    %p95 = scmp.eq.s32.totalorder %s15, 1
    %p96 = por %p94, %p95
    %p97 = scmp.ne.s32.totalorder %s88, %s89
    %p98 = scmp.eq.s32.totalorder %s15, 0
    %p99 = por %p97, %p98
    %p100 = scmp.ne.s32.totalorder %s88, %s89
    %p101 = scmp.eq.s32.totalorder %s16, 1
    %p102 = por %p100, %p101
    %p104 = scmp.ne.s32.totalorder %s89, %s103
    %p105 = scmp.eq.s32.totalorder %s16, 0
    %p106 = por %p104, %p105
    %s108 = sadd.s32 %s107, 1
    %p111 = scmp.eq.s32.totalorder %s10, 1
    %p112 = scmp.ne.s32.totalorder %s107, %s109
    %p113 = scmp.eq.s32.totalorder %s10, 0
    %p114 = por %p112, %p113
    %p115 = scmp.ne.s32.totalorder %s107, %s109
    %p116 = scmp.eq.s32.totalorder %s15, 1
    %p117 = por %p115, %p116
    %p118 = scmp.ne.s32.totalorder %s109, %s110
    %p119 = scmp.eq.s32.totalorder %s15, 0
    %p120 = por %p118, %p119
    %p121 = scmp.ne.s32.totalorder %s109, %s110
    %p122 = scmp.eq.s32.totalorder %s16, 1
    %p123 = por %p121, %p122
    %p125 = scmp.ne.s32.totalorder %s110, %s124
    %p126 = scmp.eq.s32.totalorder %s16, 0
    %p127 = por %p125, %p126
    %s128 = ssub.s32 %s17, %s29
    %s129 = ssub.s32 %s18, %s25
    %s130 = sor.u32 %s128, %s129
    %p131 = scmp.eq.s32.totalorder %s130, 0
    %s133 = sadd.s32 %s132, 1
    %s134 = scalar_select %p131, %s132, %s133
    %p137 = pneg %p131
    %p138 = scmp.eq.s32.totalorder %s10, 1
    %p139 = por %p137, %p138
    %p140 = scmp.ne.s32.totalorder %s132, %s135
    %p141 = scmp.eq.s32.totalorder %s10, 0
    %p142 = por %p140, %p141
    %p143 = scmp.ne.s32.totalorder %s132, %s135
    %p144 = scmp.eq.s32.totalorder %s15, 1
    %p145 = por %p143, %p144
    %p146 = scmp.ne.s32.totalorder %s135, %s136
    %p147 = scmp.eq.s32.totalorder %s15, 0
    %p148 = por %p146, %p147
    %p149 = scmp.ne.s32.totalorder %s135, %s136
    %p150 = scmp.eq.s32.totalorder %s16, 1
    %p151 = por %p149, %p150
    %p153 = scmp.ne.s32.totalorder %s136, %s152
    %p154 = scmp.eq.s32.totalorder %s16, 0
    %p155 = por %p153, %p154
    %p156 = scmp.le.s32.totalorder 1, %s10
    %p157 = scmp.lt.s32.totalorder %s10, 3
    %p158 = pnand %p156, %p157
    %p159 = pneg %p158
    // Predicated region
    $region9: #{resblock_pallas.5} parent=5 // pred_check
      _
    $region10: #{resblock_pallas.5} parent=5 // pred_check_branch
      %161 = sbr.rel (%p158) target = $region12
    $region11: #{resblock_pallas.5} parent=5 // pred_region
      %s162 = ssub.s32 %s10, 1
      // Predicated region
      $region13: #{resblock_pallas.5} parent=11 // pred_check
        %p163 = pneg %p99
      $region14: #{resblock_pallas.5} parent=11 // pred_check_branch
        %165 = sbr.rel (%p163) target = $region16
      $region15: #{resblock_pallas.5} parent=11 // pred_region
        _
      $region16: #{resblock_pallas.5} parent=11 // pred_fallthru
        _
      // Predicated region
      $region17: #{resblock_pallas.5} parent=11 // pred_check
        %p166 = pneg %p120
      $region18: #{resblock_pallas.5} parent=11 // pred_check_branch
        %168 = sbr.rel (%p166) target = $region20
      $region19: #{resblock_pallas.5} parent=11 // pred_region
        _
      $region20: #{resblock_pallas.5} parent=11 // pred_fallthru
        _
    $region12: #{resblock_pallas.5} parent=5 // pred_fallthru
      _
    %p169 = scmp.lt.s32.totalorder %s10, 2
    // Predicated region
    $region21: #{resblock_pallas.5} parent=5 // pred_check
      %p170 = pneg %p169
    $region22: #{resblock_pallas.5} parent=5 // pred_check_branch
      %172 = sbr.rel (%p170) target = $region24
    $region23: #{resblock_pallas.5} parent=5 // pred_region
      // Predicated region
      $region25: #{resblock_pallas.5} parent=23 // pred_check
        %p173 = pneg %p44
      $region26: #{resblock_pallas.5} parent=23 // pred_check_branch
        %175 = sbr.rel (%p173) target = $region28
      $region27: #{resblock_pallas.5} parent=23 // pred_region
        %s176 = smul.u32 2, %s18
        %p177 = scmp.lt.s32.totalorder %s17, 1
        %s178 = scalar_select %p177, %s17, 1
        %p179 = scmp.lt.s32.totalorder %s176, 1
        %s180 = scalar_select %p179, %s176, 1
        %s181 = smul.addr %s178, 2
        %s182 = sadd.s32 %s180, %s181
        %s183 = smul.addr %s182, 4
        %s184 = scalar_lea.vmem %s0, %s183
        %s185 = smul.u32 2, %s18
      $region28: #{resblock_pallas.5} parent=23 // pred_fallthru
        _
      // Predicated region
      $region29: #{resblock_pallas.5} parent=23 // pred_check
        %p186 = pneg %p72
      $region30: #{resblock_pallas.5} parent=23 // pred_check_branch
        %188 = sbr.rel (%p186) target = $region32
      $region31: #{resblock_pallas.5} parent=23 // pred_region
        %s189 = smul.u32 2, %s18
        %p190 = scmp.lt.s32.totalorder %s17, 1
        %s191 = scalar_select %p190, %s17, 1
        %p192 = scmp.lt.s32.totalorder %s189, 1
        %s193 = scalar_select %p192, %s189, 1
        %s194 = smul.addr %s191, 2
        %s195 = sadd.s32 %s193, %s194
        %s196 = smul.addr %s195, 4
        %s197 = scalar_lea.vmem %s1, %s196
        %s198 = smul.u32 2, %s18
      $region32: #{resblock_pallas.5} parent=23 // pred_fallthru
        _
    $region24: #{resblock_pallas.5} parent=5 // pred_fallthru
      _
    %p199 = scmp.le.s32.totalorder 1, %s10
    %p200 = scmp.lt.s32.totalorder %s10, 3
    %p201 = pnand %p199, %p200
    %p202 = pneg %p201
    // Predicated region
    $region33: #{resblock_pallas.5} parent=5 // pred_check
      _
    $region34: #{resblock_pallas.5} parent=5 // pred_check_branch
      %204 = sbr.rel (%p201) target = $region36
    $region35: #{resblock_pallas.5} parent=5 // pred_region
      %s205 = ssub.s32 %s10, 1
      %s206 = smul.u32 2, %s20
      %p207 = scmp.lt.s32.totalorder %s19, 1
      %s208 = scalar_select %p207, %s19, 1
      %p209 = scmp.lt.s32.totalorder %s206, 1
      %s210 = scalar_select %p209, %s206, 1
      %s211 = smul.addr %s208, 2
      %s212 = sadd.s32 %s210, %s211
      %s213 = smul.addr %s212, 4
      %s214 = scalar_lea.vmem %s0, %s213
      %p215 = pneg %p50
      %p216 = pneg %p47
      %s217 = smul.u32 2, %s20
      %p218 = scmp.lt.s32.totalorder %s19, 1
      %s219 = scalar_select %p218, %s19, 1
      %p220 = scmp.lt.s32.totalorder %s217, 1
      %s221 = scalar_select %p220, %s217, 1
      %s222 = smul.addr %s219, 2
      %s223 = sadd.s32 %s221, %s222
      %s224 = smul.addr %s223, 4
      %s225 = scalar_lea.vmem %s1, %s224
      %p226 = pneg %p78
      %p227 = pneg %p75
      %p228 = pneg %p99
      %p229 = pneg %p96
      %p230 = pneg %p120
      %p231 = pneg %p117
      %p232 = pneg %p148
      %p233 = pneg %p145
      %s234 = smul.u32 2, %s20
      %p235 = scmp.lt.s32.totalorder %s19, 1
      %s236 = scalar_select %p235, %s19, 1
      %p237 = scmp.lt.s32.totalorder %s234, 1
      %s238 = scalar_select %p237, %s234, 1
      %s239 = smul.addr %s236, 2
      %s240 = sadd.s32 %s238, %s239
      %s241 = smul.addr %s240, 4
      %s242 = scalar_lea.vmem %s4, %s241
      %s243 = smul.u32 2, %s20
      %p244 = scmp.lt.s32.totalorder %s19, 1
      %s245 = scalar_select %p244, %s19, 1
      %p246 = scmp.lt.s32.totalorder %s243, 1
      %s247 = scalar_select %p246, %s243, 1
      %s248 = smul.addr %s245, 2
      %s249 = sadd.s32 %s247, %s248
      %s250 = smul.addr %s249, 4
      %s251 = scalar_lea.vmem %s0, %s250
      %s252 = smul.u32 2, %s20
      %s253 = smul.u32 2, %s20
      %p254 = scmp.lt.s32.totalorder %s19, 1
      %s255 = scalar_select %p254, %s19, 1
      %p256 = scmp.lt.s32.totalorder %s253, 1
      %s257 = scalar_select %p256, %s253, 1
      %s258 = smul.addr %s255, 2
      %s259 = sadd.s32 %s257, %s258
      %s260 = smul.addr %s259, 4
      %s261 = scalar_lea.vmem %s1, %s260
      %s262 = smul.u32 2, %s20
      %s263 = smul.u32 2, %s20
      %p264 = scmp.lt.s32.totalorder %s19, 1
      %s265 = scalar_select %p264, %s19, 1
      %p266 = scmp.lt.s32.totalorder %s263, 1
      %s267 = scalar_select %p266, %s263, 1
      %s268 = smul.addr %s265, 2
      %s269 = sadd.s32 %s267, %s268
      %s270 = smul.addr %s269, 4
      %s271 = scalar_lea.vmem %s4, %s270
      %s272 = smul.u32 2, %s20
      %v273 = vld [vmem:[%s251] sm:$0xff]
      %v274 = vld [vmem:[%s261] sm:$0xff]
      %v275 = vld [vmem:[%s2] sm:$0xf]
      %277 = vset.pattern.permute.xlu0 0
      %278 = vperm.xlu0 %277, %v275
      %v279 = vpop.permute.xlu0 %278
      %v281 = vunpack.c.l.s4 839922192
      %v282 = vunpack.c.0.s8 %v281
      %v283 = vlaneseq
      %v284 = vshrl.u32 %v283, 7
      %v285 = vsub.s32 %v282, %v284
      %v286 = vrot.slane %v279, %v285
      %v288 = vmul.f32 %v274, %v286
      %v289 = vadd.f32 %v273, %v288
      %v290 = vld [vmem:[%s3] sm:$0xf]
      %292 = vset.pattern.permute.xlu0 0
      %293 = vperm.xlu0 %292, %v290
      %v294 = vpop.permute.xlu0 %293
      %v296 = vunpack.c.l.s4 839922192
      %v297 = vunpack.c.0.s8 %v296
      %v298 = vlaneseq
      %v299 = vshrl.u32 %v298, 7
      %v300 = vsub.s32 %v297, %v299
      %v301 = vrot.slane %v294, %v300
      %v303 = vadd.f32 %v289, %v301
      %304 = vst [vmem:[%s271] sm:$0xff] %v303
      %s305 = smul.u32 2, %s20
      %p306 = scmp.lt.s32.totalorder %s19, 1
      %s307 = scalar_select %p306, %s19, 1
      %p308 = scmp.lt.s32.totalorder %s305, 1
      %s309 = scalar_select %p308, %s305, 1
      %s310 = smul.addr %s307, 2
      %s311 = sadd.s32 %s309, %s310
      %s312 = smul.addr %s311, 4
      %s313 = scalar_lea.vmem %s4, %s312
      // Predicated region
      $region37: #{resblock_pallas.5} parent=35 // pred_check
        %p314 = pneg %p145
      $region38: #{resblock_pallas.5} parent=35 // pred_check_branch
        %316 = sbr.rel (%p314) target = $region40
      $region39: #{resblock_pallas.5} parent=35 // pred_region
        %s317 = smul.u32 2, %s20
      $region40: #{resblock_pallas.5} parent=35 // pred_fallthru
        _
    $region36: #{resblock_pallas.5} parent=5 // pred_fallthru
      _
    %p318 = scmp.le.s32.totalorder 2, %s10
    // Predicated region
    $region41: #{resblock_pallas.5} parent=5 // pred_check
      %p319 = pneg %p318
    $region42: #{resblock_pallas.5} parent=5 // pred_check_branch
      %321 = sbr.rel (%p319) target = $region44
    $region43: #{resblock_pallas.5} parent=5 // pred_region
      %s322 = ssub.s32 %s10, 2
      // Predicated region
      $region45: #{resblock_pallas.5} parent=43 // pred_check
        %p323 = pneg %p151
      $region46: #{resblock_pallas.5} parent=43 // pred_check_branch
        %325 = sbr.rel (%p323) target = $region48
      $region47: #{resblock_pallas.5} parent=43 // pred_region
        %s326 = smul.u32 2, %s22
        %p327 = scmp.lt.s32.totalorder %s21, 1
        %s328 = scalar_select %p327, %s21, 1
        %p329 = scmp.lt.s32.totalorder %s326, 1
        %s330 = scalar_select %p329, %s326, 1
        %s331 = smul.addr %s328, 2
        %s332 = sadd.s32 %s330, %s331
        %s333 = smul.addr %s332, 4
        %s334 = scalar_lea.vmem %s4, %s333
      $region48: #{resblock_pallas.5} parent=43 // pred_fallthru
        _
    $region44: #{resblock_pallas.5} parent=5 // pred_fallthru
      _
  $region6: #{resblock_pallas.5} parent=0 // loop_footer
    %s14 = sadd.s32 1, %s10
  $region7: #{resblock_pallas.5} parent=0 // loop_footer_branch
    %9 = sbr.rel target = $region3
  $region8: #{resblock_pallas.5} parent=0 // loop_exit
    _

// kernel: resblock_pallas.4
$region0: #{resblock_pallas.4}
  #allocation0 [shape = 'u32[]', space=smem, size = 0x4, offset = 0x4, fixed_abs, tag = 'smem constant byte address 0x4 - core index']
  #allocation1 [shape = 'u32[144,128]{1,0:T(1,128)}', space=vmem, size = 0x12000, scoped, tag = 'internal scratch']
  %s0 = inlined_call_operand.vmem [shape: f32[2,4,256], index: 0, kind: input, shape index: {}]
  %s1 = inlined_call_operand.vmem [shape: f32[4,4], index: 1, kind: input, shape index: {}]
  %s2 = inlined_call_operand.vmem [shape: f32[4,1], index: 2, kind: input, shape index: {}]
  %s3 = inlined_call_operand.vmem [shape: f32[4,1], index: 3, kind: input, shape index: {}]
  %s4 = inlined_call_operand.vmem [shape: f32[4,4], index: 4, kind: input, shape index: {}]
  %s5 = inlined_call_operand.vmem [shape: f32[2,4,256], index: 5, kind: output, shape index: {0}]
  %s6 = inlined_call_operand.vmem [shape: f32[4,1], index: 6, kind: output, shape index: {1}]
  %s7 = inlined_call_operand.vmem [shape: f32[4,1], index: 7, kind: output, shape index: {2}]
  %8 = xla_tuple %s5, %s6, %s7
  %s9 = sld [smem:[#allocation0]]
  $region73: #{resblock_pallas.4} parent=0
    _
  %s11 = ssub.s32 1, %s9
  %s12 = scalar_select 0, %s11, %s9
  loop: start=0, step=1, limit=4
  $region2: #{resblock_pallas.4} parent=0 // loop_pre_header
    _
  $region3: #{resblock_pallas.4} parent=0 // loop_header
    %s14 = sphi 0, %s18
    %p15 = scmp.ge.s32.totalorder %s14, 4
    %s21 = sphi 0, %s33
    %s22 = sphi 0, %s29
    %s23 = sphi 0, %s21
    %s24 = sphi 0, %s22
    %s25 = sphi 0, %s23
    %s26 = sphi 0, %s24
    %s38 = sphi 0, %s40
    %s41 = sphi 0, %s38
    %s42 = sphi 0, %s41
    %s58 = sphi 0, %s42
    %s62 = sphi 0, %s62
    %s64 = sphi 0, %s62
    %s65 = sphi 0, %s64
    %s79 = sphi 0, %s65
    %s83 = sphi 0, %s83
    %s85 = sphi 0, %s83
    %s86 = sphi 0, %s85
    %s100 = sphi 0, %s86
    %s104 = sphi 0, %s104
    %s106 = sphi 0, %s104
    %s107 = sphi 0, %s106
    %s121 = sphi 0, %s107
    %s125 = sphi 0, %s125
    %s127 = sphi 0, %s125
    %s128 = sphi 0, %s127
    %s142 = sphi 0, %s128
    %s150 = sphi 0, %s152
    %s153 = sphi 0, %s150
    %s154 = sphi 0, %s153
    %s170 = sphi 0, %s154
    %s174 = sphi 0, %s174
    %s176 = sphi 0, %s174
    %s177 = sphi 0, %s176
    %s191 = sphi 0, %s177
    %s195 = sphi 0, %s195
    %s197 = sphi 0, %s195
    %s198 = sphi 0, %s197
    %s212 = sphi 0, %s198
  $region4: #{resblock_pallas.4} parent=0 // loop_header_branch
    %17 = sbr.rel (%p15) target = $region8
  $region5: #{resblock_pallas.4} parent=0 // loop_body
    %s19 = ssub.s32 %s14, 1
    %s20 = ssub.s32 %s14, 2
    %s27 = sadd.s32 1, %s22
    %p28 = scmp.ge.s32.totalorder %s27, 1
    %s29 = scalar_select %p28, 0, %s27
    %s30 = sadd.s32 1, %s21
    %s31 = scalar_select %p28, %s30, %s21
    %p32 = scmp.ge.s32.totalorder %s31, 2
    %s33 = scalar_select %p32, 0, %s31
    %s34 = ssub.s32 %s21, %s33
    %s35 = ssub.s32 %s22, %s29
    %s36 = sor.u32 %s34, %s35
    %p37 = scmp.eq.s32.totalorder %s36, 0
    %s39 = sadd.s32 %s38, 1
    %s40 = scalar_select %p37, %s38, %s39
    %p43 = pneg %p37
    %p44 = scmp.eq.s32.totalorder %s14, 1
    %p45 = por %p43, %p44
    %p46 = scmp.ne.s32.totalorder %s38, %s41
    %p47 = scmp.eq.s32.totalorder %s14, 0
    %p48 = por %p46, %p47
    %p49 = scmp.ne.s32.totalorder %s38, %s41
    %p50 = scmp.eq.s32.totalorder %s19, 1
    %p51 = por %p49, %p50
    %p52 = scmp.ne.s32.totalorder %s41, %s42
    %p53 = scmp.eq.s32.totalorder %s19, 0
    %p54 = por %p52, %p53
    %p55 = scmp.ne.s32.totalorder %s41, %s42
    %p56 = scmp.eq.s32.totalorder %s20, 1
    %p57 = por %p55, %p56
    %p59 = scmp.ne.s32.totalorder %s42, %s58
    %p60 = scmp.eq.s32.totalorder %s20, 0
    %p61 = por %p59, %p60
    %s63 = sadd.s32 %s62, 1
    %p66 = scmp.eq.s32.totalorder %s14, 1
    %p67 = scmp.ne.s32.totalorder %s62, %s64
    %p68 = scmp.eq.s32.totalorder %s14, 0
    %p69 = por %p67, %p68
    %p70 = scmp.ne.s32.totalorder %s62, %s64
    %p71 = scmp.eq.s32.totalorder %s19, 1
    %p72 = por %p70, %p71
    %p73 = scmp.ne.s32.totalorder %s64, %s65
    %p74 = scmp.eq.s32.totalorder %s19, 0
    %p75 = por %p73, %p74
    %p76 = scmp.ne.s32.totalorder %s64, %s65
    %p77 = scmp.eq.s32.totalorder %s20, 1
    %p78 = por %p76, %p77
    %p80 = scmp.ne.s32.totalorder %s65, %s79
    %p81 = scmp.eq.s32.totalorder %s20, 0
    %p82 = por %p80, %p81
    %s84 = sadd.s32 %s83, 1
    %p87 = scmp.eq.s32.totalorder %s14, 1
    %p88 = scmp.ne.s32.totalorder %s83, %s85
    %p89 = scmp.eq.s32.totalorder %s14, 0
    %p90 = por %p88, %p89
    %p91 = scmp.ne.s32.totalorder %s83, %s85
    %p92 = scmp.eq.s32.totalorder %s19, 1
    %p93 = por %p91, %p92
    %p94 = scmp.ne.s32.totalorder %s85, %s86
    %p95 = scmp.eq.s32.totalorder %s19, 0
    %p96 = por %p94, %p95
    %p97 = scmp.ne.s32.totalorder %s85, %s86
    %p98 = scmp.eq.s32.totalorder %s20, 1
    %p99 = por %p97, %p98
    %p101 = scmp.ne.s32.totalorder %s86, %s100
    %p102 = scmp.eq.s32.totalorder %s20, 0
    %p103 = por %p101, %p102
    %s105 = sadd.s32 %s104, 1
    %p108 = scmp.eq.s32.totalorder %s14, 1
    %p109 = scmp.ne.s32.totalorder %s104, %s106
    %p110 = scmp.eq.s32.totalorder %s14, 0
    %p111 = por %p109, %p110
    %p112 = scmp.ne.s32.totalorder %s104, %s106
    %p113 = scmp.eq.s32.totalorder %s19, 1
    %p114 = por %p112, %p113
    %p115 = scmp.ne.s32.totalorder %s106, %s107
    %p116 = scmp.eq.s32.totalorder %s19, 0
    %p117 = por %p115, %p116
    %p118 = scmp.ne.s32.totalorder %s106, %s107
    %p119 = scmp.eq.s32.totalorder %s20, 1
    %p120 = por %p118, %p119
    %p122 = scmp.ne.s32.totalorder %s107, %s121
    %p123 = scmp.eq.s32.totalorder %s20, 0
    %p124 = por %p122, %p123
    %s126 = sadd.s32 %s125, 1
    %p129 = scmp.eq.s32.totalorder %s14, 1
    %p130 = scmp.ne.s32.totalorder %s125, %s127
    %p131 = scmp.eq.s32.totalorder %s14, 0
    %p132 = por %p130, %p131
    %p133 = scmp.ne.s32.totalorder %s125, %s127
    %p134 = scmp.eq.s32.totalorder %s19, 1
    %p135 = por %p133, %p134
    %p136 = scmp.ne.s32.totalorder %s127, %s128
    %p137 = scmp.eq.s32.totalorder %s19, 0
    %p138 = por %p136, %p137
    %p139 = scmp.ne.s32.totalorder %s127, %s128
    %p140 = scmp.eq.s32.totalorder %s20, 1
    %p141 = por %p139, %p140
    %p143 = scmp.ne.s32.totalorder %s128, %s142
    %p144 = scmp.eq.s32.totalorder %s20, 0
    %p145 = por %p143, %p144
    %s146 = ssub.s32 %s21, %s33
    %s147 = ssub.s32 %s22, %s29
    %s148 = sor.u32 %s146, %s147
    %p149 = scmp.eq.s32.totalorder %s148, 0
    %s151 = sadd.s32 %s150, 1
    %s152 = scalar_select %p149, %s150, %s151
    %p155 = pneg %p149
    %p156 = scmp.eq.s32.totalorder %s14, 1
    %p157 = por %p155, %p156
    %p158 = scmp.ne.s32.totalorder %s150, %s153
    %p159 = scmp.eq.s32.totalorder %s14, 0
    %p160 = por %p158, %p159
    %p161 = scmp.ne.s32.totalorder %s150, %s153
    %p162 = scmp.eq.s32.totalorder %s19, 1
    %p163 = por %p161, %p162
    %p164 = scmp.ne.s32.totalorder %s153, %s154
    %p165 = scmp.eq.s32.totalorder %s19, 0
    %p166 = por %p164, %p165
    %p167 = scmp.ne.s32.totalorder %s153, %s154
    %p168 = scmp.eq.s32.totalorder %s20, 1
    %p169 = por %p167, %p168
    %p171 = scmp.ne.s32.totalorder %s154, %s170
    %p172 = scmp.eq.s32.totalorder %s20, 0
    %p173 = por %p171, %p172
    %s175 = sadd.s32 %s174, 1
    %p178 = scmp.eq.s32.totalorder %s14, 1
    %p179 = scmp.ne.s32.totalorder %s174, %s176
    %p180 = scmp.eq.s32.totalorder %s14, 0
    %p181 = por %p179, %p180
    %p182 = scmp.ne.s32.totalorder %s174, %s176
    %p183 = scmp.eq.s32.totalorder %s19, 1
    %p184 = por %p182, %p183
    %p185 = scmp.ne.s32.totalorder %s176, %s177
    %p186 = scmp.eq.s32.totalorder %s19, 0
    %p187 = por %p185, %p186
    %p188 = scmp.ne.s32.totalorder %s176, %s177
    %p189 = scmp.eq.s32.totalorder %s20, 1
    %p190 = por %p188, %p189
    %p192 = scmp.ne.s32.totalorder %s177, %s191
    %p193 = scmp.eq.s32.totalorder %s20, 0
    %p194 = por %p192, %p193
    %s196 = sadd.s32 %s195, 1
    %p199 = scmp.eq.s32.totalorder %s14, 1
    %p200 = scmp.ne.s32.totalorder %s195, %s197
    %p201 = scmp.eq.s32.totalorder %s14, 0
    %p202 = por %p200, %p201
    %p203 = scmp.ne.s32.totalorder %s195, %s197
    %p204 = scmp.eq.s32.totalorder %s19, 1
    %p205 = por %p203, %p204
    %p206 = scmp.ne.s32.totalorder %s197, %s198
    %p207 = scmp.eq.s32.totalorder %s19, 0
    %p208 = por %p206, %p207
    %p209 = scmp.ne.s32.totalorder %s197, %s198
    %p210 = scmp.eq.s32.totalorder %s20, 1
    %p211 = por %p209, %p210
    %p213 = scmp.ne.s32.totalorder %s198, %s212
    %p214 = scmp.eq.s32.totalorder %s20, 0
    %p215 = por %p213, %p214
    %p216 = scmp.le.s32.totalorder 1, %s14
    %p217 = scmp.lt.s32.totalorder %s14, 3
    %p218 = pnand %p216, %p217
    %p219 = pneg %p218
    // Predicated region
    $region9: #{resblock_pallas.4} parent=5 // pred_check
      _
    $region10: #{resblock_pallas.4} parent=5 // pred_check_branch
      %221 = sbr.rel (%p218) target = $region12
    $region11: #{resblock_pallas.4} parent=5 // pred_region
      %s222 = ssub.s32 %s14, 1
      // Predicated region
      $region13: #{resblock_pallas.4} parent=11 // pred_check
        %p223 = pneg %p75
      $region14: #{resblock_pallas.4} parent=11 // pred_check_branch
        %225 = sbr.rel (%p223) target = $region16
      $region15: #{resblock_pallas.4} parent=11 // pred_region
        _
      $region16: #{resblock_pallas.4} parent=11 // pred_fallthru
        _
      // Predicated region
      $region17: #{resblock_pallas.4} parent=11 // pred_check
        %p226 = pneg %p96
      $region18: #{resblock_pallas.4} parent=11 // pred_check_branch
        %228 = sbr.rel (%p226) target = $region20
      $region19: #{resblock_pallas.4} parent=11 // pred_region
        _
      $region20: #{resblock_pallas.4} parent=11 // pred_fallthru
        _
      // Predicated region
      $region21: #{resblock_pallas.4} parent=11 // pred_check
        %p229 = pneg %p117
      $region22: #{resblock_pallas.4} parent=11 // pred_check_branch
        %231 = sbr.rel (%p229) target = $region24
      $region23: #{resblock_pallas.4} parent=11 // pred_region
        _
      $region24: #{resblock_pallas.4} parent=11 // pred_fallthru
        _
      // Predicated region
      $region25: #{resblock_pallas.4} parent=11 // pred_check
        %p232 = pneg %p138
      $region26: #{resblock_pallas.4} parent=11 // pred_check_branch
        %234 = sbr.rel (%p232) target = $region28
      $region27: #{resblock_pallas.4} parent=11 // pred_region
        _
      $region28: #{resblock_pallas.4} parent=11 // pred_fallthru
        _
    $region12: #{resblock_pallas.4} parent=5 // pred_fallthru
      _
    %p235 = scmp.lt.s32.totalorder %s14, 2
    // Predicated region
    $region29: #{resblock_pallas.4} parent=5 // pred_check
      %p236 = pneg %p235
    $region30: #{resblock_pallas.4} parent=5 // pred_check_branch
      %238 = sbr.rel (%p236) target = $region32
    $region31: #{resblock_pallas.4} parent=5 // pred_region
      // Predicated region
      $region33: #{resblock_pallas.4} parent=31 // pred_check
        %p239 = pneg %p48
      $region34: #{resblock_pallas.4} parent=31 // pred_check_branch
        %241 = sbr.rel (%p239) target = $region36
      $region35: #{resblock_pallas.4} parent=31 // pred_region
        %s242 = smul.u32 2, %s22
        %p243 = scmp.lt.s32.totalorder %s21, 1
        %s244 = scalar_select %p243, %s21, 1
        %p245 = scmp.lt.s32.totalorder %s242, 1
        %s246 = scalar_select %p245, %s242, 1
        %s247 = smul.addr %s244, 2
        %s248 = sadd.s32 %s246, %s247
        %s249 = smul.addr %s248, 4
        %s250 = scalar_lea.vmem %s0, %s249
        %s251 = smul.u32 2, %s22
      $region36: #{resblock_pallas.4} parent=31 // pred_fallthru
        _
    $region32: #{resblock_pallas.4} parent=5 // pred_fallthru
      _
    %p252 = scmp.le.s32.totalorder 1, %s14
    %p253 = scmp.lt.s32.totalorder %s14, 3
    %p254 = pnand %p252, %p253
    %p255 = pneg %p254
    // Predicated region
    $region37: #{resblock_pallas.4} parent=5 // pred_check
      _
    $region38: #{resblock_pallas.4} parent=5 // pred_check_branch
      %257 = sbr.rel (%p254) target = $region40
    $region39: #{resblock_pallas.4} parent=5 // pred_region
      %s258 = ssub.s32 %s14, 1
      %s259 = smul.u32 2, %s24
      %p260 = scmp.lt.s32.totalorder %s23, 1
      %s261 = scalar_select %p260, %s23, 1
      %p262 = scmp.lt.s32.totalorder %s259, 1
      %s263 = scalar_select %p262, %s259, 1
      %s264 = smul.addr %s261, 2
      %s265 = sadd.s32 %s263, %s264
      %s266 = smul.addr %s265, 4
      %s267 = scalar_lea.vmem %s0, %s266
      %p268 = pneg %p54
      %p269 = pneg %p51
      %p270 = pneg %p75
      %p271 = pneg %p72
      %p272 = pneg %p96
      %p273 = pneg %p93
      %p274 = pneg %p117
      %p275 = pneg %p114
      %p276 = pneg %p138
      %p277 = pneg %p135
      %p278 = pneg %p166
      %p279 = pneg %p163
      %s280 = smul.u32 2, %s24
      %p281 = scmp.lt.s32.totalorder %s23, 1
      %s282 = scalar_select %p281, %s23, 1
      %p283 = scmp.lt.s32.totalorder %s280, 1
      %s284 = scalar_select %p283, %s280, 1
      %s285 = smul.addr %s282, 2
      %s286 = sadd.s32 %s284, %s285
      %s287 = smul.addr %s286, 4
      %s288 = scalar_lea.vmem %s5, %s287
      %p289 = pneg %p187
      %p290 = pneg %p184
      %p291 = pneg %p208
      %p292 = pneg %p205
      %s293 = smul.u32 2, %s24
      %p294 = scmp.lt.s32.totalorder %s23, 1
      %s295 = scalar_select %p294, %s23, 1
      %p296 = scmp.lt.s32.totalorder %s293, 1
      %s297 = scalar_select %p296, %s293, 1
      %s298 = smul.addr %s295, 2
      %s299 = sadd.s32 %s297, %s298
      %s300 = smul.addr %s299, 4
      %s301 = scalar_lea.vmem %s0, %s300
      %s302 = smul.u32 2, %s24
      %s303 = smul.u32 2, %s24
      %p304 = scmp.lt.s32.totalorder %s23, 1
      %s305 = scalar_select %p304, %s23, 1
      %p306 = scmp.lt.s32.totalorder %s303, 1
      %s307 = scalar_select %p306, %s303, 1
      %s308 = smul.addr %s305, 2
      %s309 = sadd.s32 %s307, %s308
      %s310 = smul.addr %s309, 4
      %s311 = scalar_lea.vmem %s5, %s310
      %s312 = smul.u32 2, %s24
      %p313 = scmp.eq.s32.totalorder %s23, 0
      %p314 = scmp.eq.s32.totalorder %s24, 0
      %p315 = pnand %p313, %p314
      %p316 = pneg %p315
      // Predicated region
      $region41: #{resblock_pallas.4} parent=39 // pred_check
        _
      $region42: #{resblock_pallas.4} parent=39 // pred_check_branch
        %318 = sbr.rel (%p315) target = $region44
      $region43: #{resblock_pallas.4} parent=39 // pred_region
        %vm319 = vcmask 3072
        %320 = vst.msk [vmem:[%s6] sm:$0xf] %vm319, 0.0
        %321 = vst.msk [vmem:[%s7] sm:$0xf] %vm319, 0.0
      $region44: #{resblock_pallas.4} parent=39 // pred_fallthru
        _
      %v322 = vld [vmem:[%s301] sm:$0xff]
      %v323 = vmax.f32 %v322, 0.0
      %v324 = vld [vmem:[%s1] sm:$0xf]
      %v326 = vcombine.high %v323, %v323
      %vm327 = vcmask 31744
      %v329 = vsel %vm327, %v324, 0
      %vm331 = vcmask 1043456
      %v332 = vsel %vm331, %v323, 0
      %v334 = vsel %vm331, %v326, 0
      %336 = vmatprep.subr.mxu0 %v334
      %337 = vmatpush1.msra.mxu0 %v332
      %338 = vmatprep.subr.mxu0 0.0
      %339 = vmatpush1.msra.mxu0 0.0
      %340 = vmatprep.subr.mxu0 0.0
      %341 = vmatpush1.msra.mxu0 0.0
      %342 = vmatprep.subr.mxu0 0.0
      %343 = vmatpush1.msra.mxu0 0.0
      %344 = vmatprep.subr.mxu0 0.0
      %345 = vmatpush1.msra.mxu0 0.0
      %346 = vmatprep.subr.mxu0 0.0
      %347 = vmatpush1.msra.mxu0 0.0
      %348 = vmatprep.subr.mxu0 0.0
      %349 = vmatpush1.msra.mxu0 0.0
      %350 = vmatprep.subr.mxu0 0.0
      %351 = vmatpush1.msra.mxu0 0.0
      %352 = vmatprep.subr.mxu0 0.0
      %353 = vmatpush1.msra.mxu0 0.0
      %354 = vmatprep.subr.mxu0 0.0
      %355 = vmatpush1.msra.mxu0 0.0
      %356 = vmatprep.subr.mxu0 0.0
      %357 = vmatpush1.msra.mxu0 0.0
      %358 = vmatprep.subr.mxu0 0.0
      %359 = vmatpush1.msra.mxu0 0.0
      %360 = vmatprep.subr.mxu0 0.0
      %361 = vmatpush1.msra.mxu0 0.0
      %362 = vmatprep.subr.mxu0 0.0
      %363 = vmatpush1.msra.mxu0 0.0
      %364 = vmatprep.subr.mxu0 0.0
      %365 = vmatpush1.msra.mxu0 0.0
      %366 = vmatprep.subr.mxu0 0.0
      %367 = vmatpush1.msra.mxu0 0.0
      %368 = vmatprep.subr.mxu0 0.0
      %369 = vmatpush1.msra.mxu0 0.0
      %370 = vmatprep.subr.mxu0 0.0
      %371 = vmatpush1.msra.mxu0 0.0
      %372 = vmatprep.subr.mxu0 0.0
      %373 = vmatpush1.msra.mxu0 0.0
      %374 = vmatprep.subr.mxu0 0.0
      %375 = vmatpush1.msra.mxu0 0.0
      %376 = vmatprep.subr.mxu0 0.0
      %377 = vmatpush1.msra.mxu0 0.0
      %378 = vmatprep.subr.mxu0 0.0
      %379 = vmatpush1.msra.mxu0 0.0
      %380 = vmatprep.subr.mxu0 0.0
      %381 = vmatpush1.msra.mxu0 0.0
      %382 = vmatprep.subr.mxu0 0.0
      %383 = vmatpush1.msra.mxu0 0.0
      %384 = vmatprep.subr.mxu0 0.0
      %385 = vmatpush1.msra.mxu0 0.0
      %386 = vmatprep.subr.mxu0 0.0
      %387 = vmatpush1.msra.mxu0 0.0
      %388 = vmatprep.subr.mxu0 0.0
      %389 = vmatpush1.msra.mxu0 0.0
      %390 = vmatprep.subr.mxu0 0.0
      %391 = vmatpush1.msra.mxu0 0.0
      %392 = vmatprep.subr.mxu0 0.0
      %393 = vmatpush1.msra.mxu0 0.0
      %394 = vmatprep.subr.mxu0 0.0
      %395 = vmatpush1.msra.mxu0 0.0
      %396 = vmatprep.subr.mxu0 0.0
      %397 = vmatpush1.msra.mxu0 0.0
      %398 = vmatprep.subr.mxu0 0.0
      %399 = vmatpush1.msra.mxu0 0.0
      %400 = vmatprep.mubr.f32.mxu0 0.0
      %401 = vmatmul.mubr.f32.gmra.mrb[0].mxu0 %v329
      %v402 = vpop.f32.mrb[0].mxu0
      %v403 = vadd.f32 0.0, %v402
      %v404 = vpop.f32.mrb[0].mxu0
      %v405 = vadd.f32 0.0, %v404
      %406 = vdwg.mxu0
      %v407 = vld [vmem:[%s2] sm:$0xf]
      %409 = vset.pattern.permute.xlu0 0
      %410 = vperm.xlu0 %409, %v407
      %v411 = vpop.permute.xlu0 %410
      %v413 = vmul.f32 %v403, %v411
      %v414 = vmul.f32 %v405, %v411
      %v415 = vld [vmem:[%s3] sm:$0xf]
      %417 = vset.pattern.permute.xlu0 0
      %418 = vperm.xlu0 %417, %v415
      %v419 = vpop.permute.xlu0 %418
      %v421 = vadd.f32 %v413, %v419
      %v422 = vadd.f32 %v414, %v419
      %v423 = vmax.f32 %v421, 0.0
      %v424 = vmax.f32 %v422, 0.0
      %v425 = vld [vmem:[%s4] sm:$0xf]
      %v427 = vsel %vm327, %v425, 0
      %v430 = vsel %vm331, %v423, 0
      %v433 = vsel %vm331, %v424, 0
      %435 = vmatprep.subr.mxu0 %v433
      %436 = vmatpush1.msra.mxu0 %v430
      %437 = vmatprep.subr.mxu0 0.0
      %438 = vmatpush1.msra.mxu0 0.0
      %439 = vmatprep.subr.mxu0 0.0
      %440 = vmatpush1.msra.mxu0 0.0
      %441 = vmatprep.subr.mxu0 0.0
      %442 = vmatpush1.msra.mxu0 0.0
      %443 = vmatprep.subr.mxu0 0.0
      %444 = vmatpush1.msra.mxu0 0.0
      %445 = vmatprep.subr.mxu0 0.0
      %446 = vmatpush1.msra.mxu0 0.0
      %447 = vmatprep.subr.mxu0 0.0
      %448 = vmatpush1.msra.mxu0 0.0
      %449 = vmatprep.subr.mxu0 0.0
      %450 = vmatpush1.msra.mxu0 0.0
      %451 = vmatprep.subr.mxu0 0.0
      %452 = vmatpush1.msra.mxu0 0.0
      %453 = vmatprep.subr.mxu0 0.0
      %454 = vmatpush1.msra.mxu0 0.0
      %455 = vmatprep.subr.mxu0 0.0
      %456 = vmatpush1.msra.mxu0 0.0
      %457 = vmatprep.subr.mxu0 0.0
      %458 = vmatpush1.msra.mxu0 0.0
      %459 = vmatprep.subr.mxu0 0.0
      %460 = vmatpush1.msra.mxu0 0.0
      %461 = vmatprep.subr.mxu0 0.0
      %462 = vmatpush1.msra.mxu0 0.0
      %463 = vmatprep.subr.mxu0 0.0
      %464 = vmatpush1.msra.mxu0 0.0
      %465 = vmatprep.subr.mxu0 0.0
      %466 = vmatpush1.msra.mxu0 0.0
      %467 = vmatprep.subr.mxu0 0.0
      %468 = vmatpush1.msra.mxu0 0.0
      %469 = vmatprep.subr.mxu0 0.0
      %470 = vmatpush1.msra.mxu0 0.0
      %471 = vmatprep.subr.mxu0 0.0
      %472 = vmatpush1.msra.mxu0 0.0
      %473 = vmatprep.subr.mxu0 0.0
      %474 = vmatpush1.msra.mxu0 0.0
      %475 = vmatprep.subr.mxu0 0.0
      %476 = vmatpush1.msra.mxu0 0.0
      %477 = vmatprep.subr.mxu0 0.0
      %478 = vmatpush1.msra.mxu0 0.0
      %479 = vmatprep.subr.mxu0 0.0
      %480 = vmatpush1.msra.mxu0 0.0
      %481 = vmatprep.subr.mxu0 0.0
      %482 = vmatpush1.msra.mxu0 0.0
      %483 = vmatprep.subr.mxu0 0.0
      %484 = vmatpush1.msra.mxu0 0.0
      %485 = vmatprep.subr.mxu0 0.0
      %486 = vmatpush1.msra.mxu0 0.0
      %487 = vmatprep.subr.mxu0 0.0
      %488 = vmatpush1.msra.mxu0 0.0
      %489 = vmatprep.subr.mxu0 0.0
      %490 = vmatpush1.msra.mxu0 0.0
      %491 = vmatprep.subr.mxu0 0.0
      %492 = vmatpush1.msra.mxu0 0.0
      %493 = vmatprep.subr.mxu0 0.0
      %494 = vmatpush1.msra.mxu0 0.0
      %495 = vmatprep.subr.mxu0 0.0
      %496 = vmatpush1.msra.mxu0 0.0
      %497 = vmatprep.subr.mxu0 0.0
      %498 = vmatpush1.msra.mxu0 0.0
      %499 = vmatprep.mubr.f32.mxu0 0.0
      %500 = vmatmul.mubr.f32.gmra.mrb[0].mxu0 %v427
      %v501 = vpop.f32.mrb[0].mxu0
      %v502 = vadd.f32 0.0, %v501
      %v503 = vpop.f32.mrb[0].mxu0
      %v504 = vadd.f32 0.0, %v503
      %505 = vdwg.mxu0
      %v508 = vcombine.low %v502, %v504
      %510 = vst [vmem:[%s311] sm:$0xff] %v508
      %v511 = vld [vmem:[%s6] sm:$0xf]
      %v512 = vsel %vm331, %v502, 0.0
      %v513 = vsel %vm331, %v504, 0.0
      %v514 = vadd.f32 %v512, %v513
      %515 = vadd.xlane.f32.xlu0 %v514
      %v516 = vpop.xlane.xlu0 %515
      %v517 = vadd.f32 %v511, %v516
      %vm518 = vcmask 3072
      %519 = vst.msk [vmem:[%s6] sm:$0xf] %vm518, %v517
      %v520 = vld [vmem:[%s7] sm:$0xf]
      %v521 = vmul.f32 %v502, %v502
      %v522 = vmul.f32 %v504, %v504
      %v523 = vsel %vm331, %v521, 0.0
      %v524 = vsel %vm331, %v522, 0.0
      %v525 = vadd.f32 %v523, %v524
      %526 = vadd.xlane.f32.xlu0 %v525
      %v527 = vpop.xlane.xlu0 %526
      %v528 = vadd.f32 %v520, %v527
      %529 = vst.msk [vmem:[%s7] sm:$0xf] %vm518, %v528
      %s530 = smul.u32 2, %s24
      %p531 = scmp.lt.s32.totalorder %s23, 1
      %s532 = scalar_select %p531, %s23, 1
      %p533 = scmp.lt.s32.totalorder %s530, 1
      %s534 = scalar_select %p533, %s530, 1
      %s535 = smul.addr %s532, 2
      %s536 = sadd.s32 %s534, %s535
      %s537 = smul.addr %s536, 4
      %s538 = scalar_lea.vmem %s5, %s537
      // Predicated region
      $region45: #{resblock_pallas.4} parent=39 // pred_check
        %p539 = pneg %p163
      $region46: #{resblock_pallas.4} parent=39 // pred_check_branch
        %541 = sbr.rel (%p539) target = $region48
      $region47: #{resblock_pallas.4} parent=39 // pred_region
        %s542 = smul.u32 2, %s24
      $region48: #{resblock_pallas.4} parent=39 // pred_fallthru
        _
      // Predicated region
      $region49: #{resblock_pallas.4} parent=39 // pred_check
        %p543 = pneg %p184
      $region50: #{resblock_pallas.4} parent=39 // pred_check_branch
        %545 = sbr.rel (%p543) target = $region52
      $region51: #{resblock_pallas.4} parent=39 // pred_region
        _
      $region52: #{resblock_pallas.4} parent=39 // pred_fallthru
        _
      // Predicated region
      $region53: #{resblock_pallas.4} parent=39 // pred_check
        %p546 = pneg %p205
      $region54: #{resblock_pallas.4} parent=39 // pred_check_branch
        %548 = sbr.rel (%p546) target = $region56
      $region55: #{resblock_pallas.4} parent=39 // pred_region
        _
      $region56: #{resblock_pallas.4} parent=39 // pred_fallthru
        _
      // Predicated region
      $region57: #{resblock_pallas.4} parent=39 // pred_check
        %p549 = pneg %p184
      $region58: #{resblock_pallas.4} parent=39 // pred_check_branch
        %551 = sbr.rel (%p549) target = $region60
      $region59: #{resblock_pallas.4} parent=39 // pred_region
        _
      $region60: #{resblock_pallas.4} parent=39 // pred_fallthru
        _
      // Predicated region
      $region61: #{resblock_pallas.4} parent=39 // pred_check
        %p552 = pneg %p205
      $region62: #{resblock_pallas.4} parent=39 // pred_check_branch
        %554 = sbr.rel (%p552) target = $region64
      $region63: #{resblock_pallas.4} parent=39 // pred_region
        _
      $region64: #{resblock_pallas.4} parent=39 // pred_fallthru
        _
    $region40: #{resblock_pallas.4} parent=5 // pred_fallthru
      _
    %p555 = scmp.le.s32.totalorder 2, %s14
    // Predicated region
    $region65: #{resblock_pallas.4} parent=5 // pred_check
      %p556 = pneg %p555
    $region66: #{resblock_pallas.4} parent=5 // pred_check_branch
      %558 = sbr.rel (%p556) target = $region68
    $region67: #{resblock_pallas.4} parent=5 // pred_region
      %s559 = ssub.s32 %s14, 2
      // Predicated region
      $region69: #{resblock_pallas.4} parent=67 // pred_check
        %p560 = pneg %p169
      $region70: #{resblock_pallas.4} parent=67 // pred_check_branch
        %562 = sbr.rel (%p560) target = $region72
      $region71: #{resblock_pallas.4} parent=67 // pred_region
        %s563 = smul.u32 2, %s26
        %p564 = scmp.lt.s32.totalorder %s25, 1
        %s565 = scalar_select %p564, %s25, 1
        %p566 = scmp.lt.s32.totalorder %s563, 1
        %s567 = scalar_select %p566, %s563, 1
        %s568 = smul.addr %s565, 2
        %s569 = sadd.s32 %s567, %s568
        %s570 = smul.addr %s569, 4
        %s571 = scalar_lea.vmem %s5, %s570
      $region72: #{resblock_pallas.4} parent=67 // pred_fallthru
        _
    $region68: #{resblock_pallas.4} parent=5 // pred_fallthru
      _
  $region6: #{resblock_pallas.4} parent=0 // loop_footer
    %s18 = sadd.s32 1, %s14
  $region7: #{resblock_pallas.4} parent=0 // loop_footer_branch
    %13 = sbr.rel target = $region3
  $region8: #{resblock_pallas.4} parent=0 // loop_exit
    _

</llo_original>
